<compile_context>
chip_gen: v7x
topology: tpu7x:2x2x1
jax: 0.10.0
libtpu: 0.0.40
codegen_flags: <defaults>
</compile_context>

<pallas_src>
import functools

import jax
import jax.numpy as jnp
from jax.experimental import pallas as pl
from jax.experimental.pallas import tpu as pltpu


def _round_up(x, m):
    return ((x + m - 1) // m) * m


# ---------------------------------------------------------------------------
# Fused kernel factory.
# Grid = (batch_groups, time_chunks); semantics = ("parallel", "arbitrary").
# Per-invocation refs:
#   x_ref   : (C*BG, I)            streamed input chunk (time-major within group)
#   h0_ref  : (L, BG, H)           initial hidden (consumed at chunk 0)
#   per layer: w_ih (in, NG), w_hh (H, NG), b_ih (1, NG), b_hh (1, NG)
#   fc_w (H, O), fc_b (1, O)
#   y_ref   : (BG, O)              last-step logits (written at the last chunk)
#   hT_ref  : (L, BG, H)           carried hidden state (doubles as the output)
#   gi_ref  : (C*BG, NG) scratch   hoisted per-chunk input projection
#   seq_ref : (C*BG, H)  scratch   inter-layer sequence (only if L > 1)
# Gate columns are contiguous in torch order (r, z, n) at offsets (0, H, 2H);
# columns [3H, NG) are zero padding and never read.
# ---------------------------------------------------------------------------
def _make_seq_gru_kernel(T, C, BG, H, NG, O, L, unroll):

    def kernel(*refs):
        x_ref, h0_ref = refs[0], refs[1]
        p = 2
        layers = []
        for _ in range(L):
            layers.append(tuple(refs[p:p + 4]))   # (w_ih, w_hh, b_ih, b_hh)
            p += 4
        fcw_ref, fcb_ref = refs[p], refs[p + 1]
        p += 2
        y_ref, hT_ref = refs[p], refs[p + 1]
        p += 2
        gi_ref = refs[p]
        p += 1
        seq_ref = refs[p] if L > 1 else None

        c = pl.program_id(1)
        base_t = c * C

        # First chunk of this batch group: load h0 into the carried output block.
        @pl.when(c == 0)
        def _():
            hT_ref[...] = h0_ref[...]

        h_top = None
        for l in range(L):
            w_ih_ref, w_hh_ref, b_ih_ref, b_hh_ref = layers[l]

            # Hoisted input projection for the whole chunk: one matmul instead of
            # C small ones; only h @ W_hh stays on the serial recurrence.
            src = x_ref[...] if l == 0 else seq_ref[...]
            gi_ref[...] = (
                jnp.dot(src, w_ih_ref[...], preferred_element_type=jnp.float32)
                + b_ih_ref[...])

            # Hoist the bias broadcast out of the time loop (JAX does not CSE it).
            b_hh_b = jnp.broadcast_to(b_hh_ref[...], (BG, NG))
            store_seq = l < L - 1
            h_init = hT_ref[l]                                      # (BG, H)

            def step(t, h, _w_hh_ref=w_hh_ref, _b_hh=b_hh_b, _store=store_seq):
                start = pl.multiple_of(t * BG, BG)
                gi = gi_ref[pl.ds(start, BG), :]                    # (BG, NG)
                gh = jnp.dot(h, _w_hh_ref[...],
                             preferred_element_type=jnp.float32) + _b_hh
                a = gi + gh
                r = jax.nn.sigmoid(a[:, 0:H])
                z = jax.nn.sigmoid(a[:, H:2 * H])
                n = jnp.tanh(gi[:, 2 * H:3 * H] + r * gh[:, 2 * H:3 * H])
                h_new = (1.0 - z) * n + z * h
                # Freeze the state on padded steps of a ragged last chunk.
                h_new = jnp.where(base_t + t < T, h_new, h)
                if _store:
                    seq_ref[pl.ds(start, BG), :] = h_new
                return h_new

            h_l = jax.lax.fori_loop(0, C, step, h_init, unroll=unroll)
            hT_ref[l] = h_l
            h_top = h_l

        # fc head on the final hidden of the top layer (== out[-1] of the GRU),
        # emitted once on the last time chunk.  The batch-axis LogSoftmax couples
        # all batch groups and is applied in the (jitted) wrapper.
        @pl.when(c == pl.num_programs(1) - 1)
        def _():
            y_ref[...] = (
                jnp.dot(h_top, fcw_ref[...], preferred_element_type=jnp.float32)
                + fcb_ref[...])

    return kernel


# ---------------------------------------------------------------------------
# Parameter preparation: PyTorch-layout weights -> kernel layout.
#   raw_layers: [(w_ih (3H, in), w_hh (3H, H), b_ih (3H,), b_hh (3H,)), ...]
#               PyTorch nn.GRU layout, gate order (r, z, n).
#   fc_w: (O, H), fc_b: (O,)
# Kernel layout: transposed, gate columns contiguous at stride H, zero-padded
# to NG = round_up(3H, 128) lanes; hidden dimension kept at exactly H.
# ---------------------------------------------------------------------------
def prepare_params(raw_layers, fc_w, fc_b):
    H = raw_layers[0][1].shape[1]
    NG = _round_up(3 * H, 128)

    def pad_cols(m):
        m = m.astype(jnp.float32)
        if m.shape[1] == NG:
            return m
        pad = jnp.zeros((m.shape[0], NG - m.shape[1]), jnp.float32)
        return jnp.concatenate([m, pad], axis=1)

    layers = []
    for (w_ih, w_hh, b_ih, b_hh) in raw_layers:
        layers.append((
            pad_cols(w_ih.T),                       # (in, NG)
            pad_cols(w_hh.T),                       # (H, NG)
            pad_cols(b_ih.reshape(1, -1)),          # (1, NG)
            pad_cols(b_hh.reshape(1, -1)),          # (1, NG)
        ))
    fc_w_p = fc_w.T.astype(jnp.float32)             # (H, O)
    fc_b_p = fc_b.reshape(1, -1).astype(jnp.float32)  # (1, O)
    return tuple(layers), fc_w_p, fc_b_p


def _pick_time_chunk(T, BG, NG, H, L, budget_bytes=4 << 20):
    per_step = 4 * BG * (NG + (H if L > 1 else 0))
    return int(max(1, min(T, budget_bytes // per_step)))


def _vmem_limit_bytes(C, BG, I, NG, H, O, L, layer_params):
    lane = lambda n: _round_up(max(int(n), 1), 128)
    sub = lambda n: _round_up(max(int(n), 1), 8)
    tile = lambda r, c: sub(r) * lane(c) * 4
    est = 0
    est += 2 * tile(C * BG, I)                      # streamed x chunk (double-buffered)
    est += 4 * L * tile(BG, H)                      # h0 + hT blocks
    est += 2 * tile(BG, O)                          # logits block
    for lp in layer_params:
        for w in lp:
            est += tile(w.shape[0], w.shape[1])
    est += tile(H, O) + tile(1, O)                  # fc
    est += tile(C * BG, NG)                         # gi scratch
    if L > 1:
        est += tile(C * BG, H)                      # inter-layer sequence scratch
    est = int(est * 1.5) + (1 << 20)
    # Clamp so the same sizing is valid on v7x (64 MiB physical VMEM).
    return int(min(64 << 20, max(est, 16 << 20)))


# ---------------------------------------------------------------------------
# Forward wrapper: pad batch, chunk time, run the fused kernel, finish with the
# (cross-batch-group) LogSoftmax and slice the padding back off.
# ---------------------------------------------------------------------------
@functools.partial(jax.jit, static_argnames=("time_chunk",))
def seq_gru_forward(x, h0, layer_params, fc_w_p, fc_b_p, *, time_chunk=None):
    T, B, I = x.shape
    L, _, H = h0.shape
    NG = layer_params[0][1].shape[1]
    O = fc_w_p.shape[1]

    # Batch grouping: pad to a sublane multiple; large batches are sharded over a
    # "parallel" grid axis (uses both TensorCores on v7x).
    B_pad = max(8, _round_up(B, 8))
    if B_pad > 128:
        BG = 128
        B_pad = _round_up(B, 128)
    else:
        BG = B_pad
    NB = B_pad // BG

    # Time chunking: bounded VMEM regardless of T.
    C = time_chunk if time_chunk is not None else _pick_time_chunk(T, BG, NG, H, L)
    C = int(max(1, min(C, T)))
    NC = -(-T // C)
    T_pad = NC * C

    x_p = jnp.zeros((T_pad, B_pad, I), jnp.float32).at[:T, :B, :].set(
        x.astype(jnp.float32))
    # (NB, T_pad*BG, I): per batch group, time-major rows -> contiguous chunk DMAs.
    x_r = x_p.reshape(T_pad, NB, BG, I).transpose(1, 0, 2, 3).reshape(NB, T_pad * BG, I)
    h0_p = jnp.zeros((L, B_pad, H), jnp.float32).at[:, :B, :].set(
        h0.astype(jnp.float32))

    in_specs = [
        pl.BlockSpec((None, C * BG, I), lambda b, c: (b, c, 0)),   # x chunk
        pl.BlockSpec((L, BG, H), lambda b, c: (0, b, 0)),          # h0
    ]
    flat_inputs = [x_r, h0_p]
    for lp in layer_params:
        for w in lp:
            flat_inputs.append(w)
            in_specs.append(pl.BlockSpec(w.shape, lambda b, c: (0, 0)))
    for w in (fc_w_p, fc_b_p):
        flat_inputs.append(w)
        in_specs.append(pl.BlockSpec(w.shape, lambda b, c: (0, 0)))

    out_shape = (jax.ShapeDtypeStruct((B_pad, O), jnp.float32),
                 jax.ShapeDtypeStruct((L, B_pad, H), jnp.float32))
    out_specs = (pl.BlockSpec((BG, O), lambda b, c: (b, 0)),
                 pl.BlockSpec((L, BG, H), lambda b, c: (0, b, 0)))

    scratch = [pltpu.VMEM((C * BG, NG), jnp.float32)]              # chunk projection
    if L > 1:
        scratch.append(pltpu.VMEM((C * BG, H), jnp.float32))       # inter-layer seq

    unroll = int(min(C, 8))
    kernel = _make_seq_gru_kernel(T, C, BG, H, NG, O, L, unroll)

    logits_p, hT_p = pl.pallas_call(
        kernel,
        grid=(NB, NC),
        in_specs=in_specs,
        out_specs=out_specs,
        out_shape=out_shape,
        scratch_shapes=scratch,
        compiler_params=pltpu.CompilerParams(
            dimension_semantics=("parallel", "arbitrary"),
            vmem_limit_bytes=_vmem_limit_bytes(C, BG, I, NG, H, O, L, layer_params)),
    )(*flat_inputs)

    # Faithful to the module: LogSoftmax(dim=1) over (T, B, O) then out[-1]
    # == log-softmax over the BATCH axis of the last-step logits.
    y = jax.nn.log_softmax(logits_p[:B, :], axis=0)
    return y, hT_p[:, :B, :]


# ---------------------------------------------------------------------------
# Pure-JAX reference mirroring the PyTorch math (for correctness checking).
# ---------------------------------------------------------------------------
def seq_gru_reference(x, h0, raw_layers, fc_w, fc_b):
    T = x.shape[0]
    H = h0.shape[-1]
    inp = x
    h_finals = []
    for l, (w_ih, w_hh, b_ih, b_hh) in enumerate(raw_layers):
        h = h0[l]
        outs = []
        for t in range(T):
            gi = inp[t] @ w_ih.T + b_ih
            gh = h @ w_hh.T + b_hh
            r = jax.nn.sigmoid(gi[:, :H] + gh[:, :H])
            z = jax.nn.sigmoid(gi[:, H:2 * H] + gh[:, H:2 * H])
            n = jnp.tanh(gi[:, 2 * H:] + r * gh[:, 2 * H:])
            h = (1.0 - z) * n + z * h
            outs.append(h)
        inp = jnp.stack(outs, axis=0)
        h_finals.append(h)
    hidden = jnp.stack(h_finals, axis=0)
    logits = inp[-1] @ fc_w.T + fc_b
    y = jax.nn.log_softmax(logits, axis=0)        # LogSoftmax(dim=1) on (T,B,O), then [-1]
    return y, hidden


if __name__ == "__main__":
    # Small shapes consistent with the module (DNA-like one-hot input, hidden=32).
    T, B = 8, 2                  # sequence length, batch
    INPUT_SIZE = 4               # vocab / one-hot width fed to nn.GRU
    HIDDEN = 32
    OUTPUT = 2
    N_LAYERS = 1                 # argparse default

    key = jax.random.PRNGKey(0)
    k_x, k_p = jax.random.split(key)

    x = jax.random.normal(k_x, (T, B, INPUT_SIZE), dtype=jnp.float32)
    h0 = jnp.zeros((N_LAYERS, B, HIDDEN), dtype=jnp.float32)          # init_hidden

    # Deterministic init mimicking PyTorch U(-1/sqrt(H), 1/sqrt(H)), PyTorch layout.
    bound = 1.0 / float(HIDDEN) ** 0.5
    raw_layers = []
    pk = k_p
    for l in range(N_LAYERS):
        in_dim = INPUT_SIZE if l == 0 else HIDDEN
        pk, k1, k2, k3, k4 = jax.random.split(pk, 5)
        raw_layers.append((
            jax.random.uniform(k1, (3 * HIDDEN, in_dim), jnp.float32, -bound, bound),
            jax.random.uniform(k2, (3 * HIDDEN, HIDDEN), jnp.float32, -bound, bound),
            jax.random.uniform(k3, (3 * HIDDEN,), jnp.float32, -bound, bound),
            jax.random.uniform(k4, (3 * HIDDEN,), jnp.float32, -bound, bound),
        ))
    pk, k5, k6 = jax.random.split(pk, 3)
    fc_w = jax.random.uniform(k5, (OUTPUT, HIDDEN), jnp.float32, -bound, bound)
    fc_b = jax.random.uniform(k6, (OUTPUT,), jnp.float32, -bound, bound)

    layer_params, fc_w_p, fc_b_p = prepare_params(raw_layers, fc_w, fc_b)

    # time_chunk=4 -> two time chunks: exercises the streamed-x pipeline and the
    # cross-chunk hidden-state carry (pl.when init at chunk 0).
    y, hidden = seq_gru_forward(x, h0, layer_params, fc_w_p, fc_b_p, time_chunk=4)
    y = jax.block_until_ready(y)
    hidden = jax.block_until_ready(hidden)

    # Correctness check against the pure-JAX reference of the PyTorch math.
    y_ref, hidden_ref = seq_gru_reference(x, h0, raw_layers, fc_w, fc_b)
    assert y.shape == (B, OUTPUT) and hidden.shape == (N_LAYERS, B, HIDDEN)
    assert jnp.allclose(y, y_ref, atol=1e-4, rtol=1e-4), "output mismatch"
    assert jnp.allclose(hidden, hidden_ref, atol=1e-4, rtol=1e-4), "hidden mismatch"

    # TODO(synk): self.embed (nn.Embedding) is unused in SeqGRU.forward() and is not implemented.
    print("KERNEL_OK")
</pallas_src>

<mosaic_0001>
module attributes {stable_mosaic.version = 11 : i64} {
  func.func @kernel(%arg0: i32, %arg1: i32, %arg2: memref<1x32x4xf32, #tpu.memory_space<vmem>>, %arg3: memref<1x8x32xf32, #tpu.memory_space<vmem>>, %arg4: memref<4x128xf32, #tpu.memory_space<vmem>>, %arg5: memref<32x128xf32, #tpu.memory_space<vmem>>, %arg6: memref<1x128xf32, #tpu.memory_space<vmem>>, %arg7: memref<1x128xf32, #tpu.memory_space<vmem>>, %arg8: memref<32x2xf32, #tpu.memory_space<vmem>>, %arg9: memref<1x2xf32, #tpu.memory_space<vmem>>, %arg10: memref<8x2xf32, #tpu.memory_space<vmem>>, %arg11: memref<1x8x32xf32, #tpu.memory_space<vmem>>, %arg12: memref<32x128xf32, #tpu.memory_space<vmem>>) attributes {dimension_semantics = [#tpu.dimension_semantics<parallel>, #tpu.dimension_semantics<arbitrary>], iteration_bounds = array<i64: 1, 2>, scalar_prefetch = 0 : i64, scratch_operands = 1 : i64, tpu.core_type = #tpu.core_type<tc>, window_params = [{transform_indices = @transform_0, window_bounds = array<i64: 1, 32, 4>}, {transform_indices = @transform_1, window_bounds = array<i64: 1, 8, 32>}, {pipeline_mode = #tpu.pipeline_mode<synchronous>, transform_indices = @transform_2, window_bounds = array<i64: 4, 128>}, {pipeline_mode = #tpu.pipeline_mode<synchronous>, transform_indices = @transform_3, window_bounds = array<i64: 32, 128>}, {pipeline_mode = #tpu.pipeline_mode<synchronous>, transform_indices = @transform_4, window_bounds = array<i64: 1, 128>}, {pipeline_mode = #tpu.pipeline_mode<synchronous>, transform_indices = @transform_5, window_bounds = array<i64: 1, 128>}, {pipeline_mode = #tpu.pipeline_mode<synchronous>, transform_indices = @transform_6, window_bounds = array<i64: 32, 2>}, {pipeline_mode = #tpu.pipeline_mode<synchronous>, transform_indices = @transform_7, window_bounds = array<i64: 1, 2>}, {transform_indices = @transform_8, window_bounds = array<i64: 8, 2>}, {transform_indices = @transform_9, window_bounds = array<i64: 1, 8, 32>}]} {
    %c4_i32 = arith.constant 4 : i32
    %0 = arith.muli %arg1, %c4_i32 : i32
    %c0_i32 = arith.constant 0 : i32
    %1 = arith.cmpi eq, %arg1, %c0_i32 : i32
    %2 = arith.extui %1 : i1 to i32
    %c0_i32_0 = arith.constant 0 : i32
    %3 = arith.cmpi ne, %2, %c0_i32_0 : i32
    scf.if %3 {
      %c0_56 = arith.constant 0 : index
      %c0_57 = arith.constant 0 : index
      %c0_58 = arith.constant 0 : index
      %155 = vector.load %arg3[%c0_56, %c0_57, %c0_58] : memref<1x8x32xf32, #tpu.memory_space<vmem>>, vector<1x8x32xf32>
      %c0_59 = arith.constant 0 : index
      %c0_60 = arith.constant 0 : index
      %c0_61 = arith.constant 0 : index
      %156 = vector.load %arg11[%c0_59, %c0_60, %c0_61] : memref<1x8x32xf32, #tpu.memory_space<vmem>>, vector<1x8x32xf32>
      tpu.vector_store %arg11[%c0_59, %c0_60, %c0_61], %155 {strides = array<i32>} : memref<1x8x32xf32, #tpu.memory_space<vmem>>, vector<1x8x32xf32>,
    } else {
    }
    %c0 = arith.constant 0 : index
    %c0_1 = arith.constant 0 : index
    %c0_2 = arith.constant 0 : index
    %4 = vector.load %arg2[%c0, %c0_1, %c0_2] : memref<1x32x4xf32, #tpu.memory_space<vmem>>, vector<1x32x4xf32>
    %5 = vector.shape_cast %4 : vector<1x32x4xf32> to vector<32x4xf32>
    %c0_3 = arith.constant 0 : index
    %c0_4 = arith.constant 0 : index
    %6 = vector.load %arg4[%c0_3, %c0_4] : memref<4x128xf32, #tpu.memory_space<vmem>>, vector<4x128xf32>
    %cst = arith.constant dense<0.000000e+00> : vector<32x128xf32>
    %7 = tpu.matmul %5, %6, %cst {dimension_numbers = #tpu.dot_dimension_numbers<[1], [0], [0], [1], [0, 0, 1, 1], [], []>} : vector<32x4xf32>, vector<4x128xf32>, vector<32x128xf32> -> vector<32x128xf32>
    %c0_5 = arith.constant 0 : index
    %c0_6 = arith.constant 0 : index
    %8 = vector.load %arg6[%c0_5, %c0_6] : memref<1x128xf32, #tpu.memory_space<vmem>>, vector<1x128xf32>
    %9 = vector.broadcast %8 : vector<1x128xf32> to vector<32x128xf32>
    %10 = arith.addf %7, %9 : vector<32x128xf32>
    %c0_7 = arith.constant 0 : index
    %c0_8 = arith.constant 0 : index
    %11 = vector.load %arg12[%c0_7, %c0_8] : memref<32x128xf32, #tpu.memory_space<vmem>>, vector<32x128xf32>
    tpu.vector_store %arg12[%c0_7, %c0_8], %10 {strides = array<i32>} : memref<32x128xf32, #tpu.memory_space<vmem>>, vector<32x128xf32>,
    %c0_9 = arith.constant 0 : index
    %c0_10 = arith.constant 0 : index
    %12 = vector.load %arg7[%c0_9, %c0_10] : memref<1x128xf32, #tpu.memory_space<vmem>>, vector<1x128xf32>
    %13 = vector.shape_cast %12 : vector<1x128xf32> to vector<1x128xf32>
    %14 = vector.broadcast %13 : vector<1x128xf32> to vector<8x128xf32>
    %c0_11 = arith.constant 0 : index
    %c0_12 = arith.constant 0 : index
    %c0_13 = arith.constant 0 : index
    %15 = vector.load %arg11[%c0_11, %c0_12, %c0_13] : memref<1x8x32xf32, #tpu.memory_space<vmem>>, vector<1x8x32xf32>
    %16 = vector.shape_cast %15 : vector<1x8x32xf32> to vector<8x32xf32>
    %c0_i32_14 = arith.constant 0 : i32
    %c8_i32 = arith.constant 8 : i32
    %17 = arith.muli %c0_i32_14, %c8_i32 : i32
    %18 = tpu.assume_multiple %17, 8 : i32
    %19 = arith.index_cast %18 : i32 to index
    %c0_15 = arith.constant 0 : index
    %20 = vector.load %arg12[%19, %c0_15] : memref<32x128xf32, #tpu.memory_space<vmem>>, vector<8x128xf32>
    %c0_16 = arith.constant 0 : index
    %c0_17 = arith.constant 0 : index
    %21 = vector.load %arg5[%c0_16, %c0_17] : memref<32x128xf32, #tpu.memory_space<vmem>>, vector<32x128xf32>
    %cst_18 = arith.constant dense<0.000000e+00> : vector<8x128xf32>
    %22 = tpu.matmul %16, %21, %cst_18 {dimension_numbers = #tpu.dot_dimension_numbers<[1], [0], [0], [1], [0, 0, 1, 1], [], []>} : vector<8x32xf32>, vector<32x128xf32>, vector<8x128xf32> -> vector<8x128xf32>
    %23 = arith.addf %22, %14 : vector<8x128xf32>
    %24 = arith.addf %20, %23 : vector<8x128xf32>
    %25 = vector.extract_strided_slice %24 {offsets = [0, 0], sizes = [8, 32], strides = [1, 1]} : vector<8x128xf32> to vector<8x32xf32>
    %26 = arith.negf %25 : vector<8x32xf32>
    %27 = math.exp %26 : vector<8x32xf32>
    %cst_19 = arith.constant 1.000000e+00 : f32
    %28 = vector.broadcast %cst_19 : f32 to vector<8x32xf32>
    %29 = arith.addf %28, %27 : vector<8x32xf32>
    %30 = arith.divf %28, %29 : vector<8x32xf32>
    %31 = vector.extract_strided_slice %24 {offsets = [0, 32], sizes = [8, 32], strides = [1, 1]} : vector<8x128xf32> to vector<8x32xf32>
    %32 = arith.negf %31 : vector<8x32xf32>
    %33 = math.exp %32 : vector<8x32xf32>
    %cst_20 = arith.constant 1.000000e+00 : f32
    %34 = vector.broadcast %cst_20 : f32 to vector<8x32xf32>
    %35 = arith.addf %34, %33 : vector<8x32xf32>
    %36 = arith.divf %34, %35 : vector<8x32xf32>
    %37 = vector.extract_strided_slice %20 {offsets = [0, 64], sizes = [8, 32], strides = [1, 1]} : vector<8x128xf32> to vector<8x32xf32>
    %38 = vector.extract_strided_slice %23 {offsets = [0, 64], sizes = [8, 32], strides = [1, 1]} : vector<8x128xf32> to vector<8x32xf32>
    %39 = arith.mulf %30, %38 : vector<8x32xf32>
    %40 = arith.addf %37, %39 : vector<8x32xf32>
    %41 = math.tanh %40 : vector<8x32xf32>
    %cst_21 = arith.constant 1.000000e+00 : f32
    %42 = vector.broadcast %cst_21 : f32 to vector<8x32xf32>
    %43 = arith.subf %42, %36 : vector<8x32xf32>
    %44 = arith.mulf %43, %41 : vector<8x32xf32>
    %45 = arith.mulf %36, %16 : vector<8x32xf32>
    %46 = arith.addf %44, %45 : vector<8x32xf32>
    %47 = arith.addi %0, %c0_i32_14 : i32
    %c8_i32_22 = arith.constant 8 : i32
    %48 = arith.cmpi slt, %47, %c8_i32_22 : i32
    %49 = arith.select %48, %46, %16 : vector<8x32xf32>
    %c1_i32 = arith.constant 1 : i32
    %c8_i32_23 = arith.constant 8 : i32
    %50 = arith.muli %c1_i32, %c8_i32_23 : i32
    %51 = tpu.assume_multiple %50, 8 : i32
    %52 = arith.index_cast %51 : i32 to index
    %c0_24 = arith.constant 0 : index
    %53 = vector.load %arg12[%52, %c0_24] : memref<32x128xf32, #tpu.memory_space<vmem>>, vector<8x128xf32>
    %c0_25 = arith.constant 0 : index
    %c0_26 = arith.constant 0 : index
    %54 = vector.load %arg5[%c0_25, %c0_26] : memref<32x128xf32, #tpu.memory_space<vmem>>, vector<32x128xf32>
    %cst_27 = arith.constant dense<0.000000e+00> : vector<8x128xf32>
    %55 = tpu.matmul %49, %54, %cst_27 {dimension_numbers = #tpu.dot_dimension_numbers<[1], [0], [0], [1], [0, 0, 1, 1], [], []>} : vector<8x32xf32>, vector<32x128xf32>, vector<8x128xf32> -> vector<8x128xf32>
    %56 = arith.addf %55, %14 : vector<8x128xf32>
    %57 = arith.addf %53, %56 : vector<8x128xf32>
    %58 = vector.extract_strided_slice %57 {offsets = [0, 0], sizes = [8, 32], strides = [1, 1]} : vector<8x128xf32> to vector<8x32xf32>
    %59 = arith.negf %58 : vector<8x32xf32>
    %60 = math.exp %59 : vector<8x32xf32>
    %cst_28 = arith.constant 1.000000e+00 : f32
    %61 = vector.broadcast %cst_28 : f32 to vector<8x32xf32>
    %62 = arith.addf %61, %60 : vector<8x32xf32>
    %63 = arith.divf %61, %62 : vector<8x32xf32>
    %64 = vector.extract_strided_slice %57 {offsets = [0, 32], sizes = [8, 32], strides = [1, 1]} : vector<8x128xf32> to vector<8x32xf32>
    %65 = arith.negf %64 : vector<8x32xf32>
    %66 = math.exp %65 : vector<8x32xf32>
    %cst_29 = arith.constant 1.000000e+00 : f32
    %67 = vector.broadcast %cst_29 : f32 to vector<8x32xf32>
    %68 = arith.addf %67, %66 : vector<8x32xf32>
    %69 = arith.divf %67, %68 : vector<8x32xf32>
    %70 = vector.extract_strided_slice %53 {offsets = [0, 64], sizes = [8, 32], strides = [1, 1]} : vector<8x128xf32> to vector<8x32xf32>
    %71 = vector.extract_strided_slice %56 {offsets = [0, 64], sizes = [8, 32], strides = [1, 1]} : vector<8x128xf32> to vector<8x32xf32>
    %72 = arith.mulf %63, %71 : vector<8x32xf32>
    %73 = arith.addf %70, %72 : vector<8x32xf32>
    %74 = math.tanh %73 : vector<8x32xf32>
    %cst_30 = arith.constant 1.000000e+00 : f32
    %75 = vector.broadcast %cst_30 : f32 to vector<8x32xf32>
    %76 = arith.subf %75, %69 : vector<8x32xf32>
    %77 = arith.mulf %76, %74 : vector<8x32xf32>
    %78 = arith.mulf %69, %49 : vector<8x32xf32>
    %79 = arith.addf %77, %78 : vector<8x32xf32>
    %80 = arith.addi %0, %c1_i32 : i32
    %c8_i32_31 = arith.constant 8 : i32
    %81 = arith.cmpi slt, %80, %c8_i32_31 : i32
    %82 = arith.select %81, %79, %49 : vector<8x32xf32>
    %c2_i32 = arith.constant 2 : i32
    %c8_i32_32 = arith.constant 8 : i32
    %83 = arith.muli %c2_i32, %c8_i32_32 : i32
    %84 = tpu.assume_multiple %83, 8 : i32
    %85 = arith.index_cast %84 : i32 to index
    %c0_33 = arith.constant 0 : index
    %86 = vector.load %arg12[%85, %c0_33] : memref<32x128xf32, #tpu.memory_space<vmem>>, vector<8x128xf32>
    %c0_34 = arith.constant 0 : index
    %c0_35 = arith.constant 0 : index
    %87 = vector.load %arg5[%c0_34, %c0_35] : memref<32x128xf32, #tpu.memory_space<vmem>>, vector<32x128xf32>
    %cst_36 = arith.constant dense<0.000000e+00> : vector<8x128xf32>
    %88 = tpu.matmul %82, %87, %cst_36 {dimension_numbers = #tpu.dot_dimension_numbers<[1], [0], [0], [1], [0, 0, 1, 1], [], []>} : vector<8x32xf32>, vector<32x128xf32>, vector<8x128xf32> -> vector<8x128xf32>
    %89 = arith.addf %88, %14 : vector<8x128xf32>
    %90 = arith.addf %86, %89 : vector<8x128xf32>
    %91 = vector.extract_strided_slice %90 {offsets = [0, 0], sizes = [8, 32], strides = [1, 1]} : vector<8x128xf32> to vector<8x32xf32>
    %92 = arith.negf %91 : vector<8x32xf32>
    %93 = math.exp %92 : vector<8x32xf32>
    %cst_37 = arith.constant 1.000000e+00 : f32
    %94 = vector.broadcast %cst_37 : f32 to vector<8x32xf32>
    %95 = arith.addf %94, %93 : vector<8x32xf32>
    %96 = arith.divf %94, %95 : vector<8x32xf32>
    %97 = vector.extract_strided_slice %90 {offsets = [0, 32], sizes = [8, 32], strides = [1, 1]} : vector<8x128xf32> to vector<8x32xf32>
    %98 = arith.negf %97 : vector<8x32xf32>
    %99 = math.exp %98 : vector<8x32xf32>
    %cst_38 = arith.constant 1.000000e+00 : f32
    %100 = vector.broadcast %cst_38 : f32 to vector<8x32xf32>
    %101 = arith.addf %100, %99 : vector<8x32xf32>
    %102 = arith.divf %100, %101 : vector<8x32xf32>
    %103 = vector.extract_strided_slice %86 {offsets = [0, 64], sizes = [8, 32], strides = [1, 1]} : vector<8x128xf32> to vector<8x32xf32>
    %104 = vector.extract_strided_slice %89 {offsets = [0, 64], sizes = [8, 32], strides = [1, 1]} : vector<8x128xf32> to vector<8x32xf32>
    %105 = arith.mulf %96, %104 : vector<8x32xf32>
    %106 = arith.addf %103, %105 : vector<8x32xf32>
    %107 = math.tanh %106 : vector<8x32xf32>
    %cst_39 = arith.constant 1.000000e+00 : f32
    %108 = vector.broadcast %cst_39 : f32 to vector<8x32xf32>
    %109 = arith.subf %108, %102 : vector<8x32xf32>
    %110 = arith.mulf %109, %107 : vector<8x32xf32>
    %111 = arith.mulf %102, %82 : vector<8x32xf32>
    %112 = arith.addf %110, %111 : vector<8x32xf32>
    %113 = arith.addi %0, %c2_i32 : i32
    %c8_i32_40 = arith.constant 8 : i32
    %114 = arith.cmpi slt, %113, %c8_i32_40 : i32
    %115 = arith.select %114, %112, %82 : vector<8x32xf32>
    %c3_i32 = arith.constant 3 : i32
    %c8_i32_41 = arith.constant 8 : i32
    %116 = arith.muli %c3_i32, %c8_i32_41 : i32
    %117 = tpu.assume_multiple %116, 8 : i32
    %118 = arith.index_cast %117 : i32 to index
    %c0_42 = arith.constant 0 : index
    %119 = vector.load %arg12[%118, %c0_42] : memref<32x128xf32, #tpu.memory_space<vmem>>, vector<8x128xf32>
    %c0_43 = arith.constant 0 : index
    %c0_44 = arith.constant 0 : index
    %120 = vector.load %arg5[%c0_43, %c0_44] : memref<32x128xf32, #tpu.memory_space<vmem>>, vector<32x128xf32>
    %cst_45 = arith.constant dense<0.000000e+00> : vector<8x128xf32>
    %121 = tpu.matmul %115, %120, %cst_45 {dimension_numbers = #tpu.dot_dimension_numbers<[1], [0], [0], [1], [0, 0, 1, 1], [], []>} : vector<8x32xf32>, vector<32x128xf32>, vector<8x128xf32> -> vector<8x128xf32>
    %122 = arith.addf %121, %14 : vector<8x128xf32>
    %123 = arith.addf %119, %122 : vector<8x128xf32>
    %124 = vector.extract_strided_slice %123 {offsets = [0, 0], sizes = [8, 32], strides = [1, 1]} : vector<8x128xf32> to vector<8x32xf32>
    %125 = arith.negf %124 : vector<8x32xf32>
    %126 = math.exp %125 : vector<8x32xf32>
    %cst_46 = arith.constant 1.000000e+00 : f32
    %127 = vector.broadcast %cst_46 : f32 to vector<8x32xf32>
    %128 = arith.addf %127, %126 : vector<8x32xf32>
    %129 = arith.divf %127, %128 : vector<8x32xf32>
    %130 = vector.extract_strided_slice %123 {offsets = [0, 32], sizes = [8, 32], strides = [1, 1]} : vector<8x128xf32> to vector<8x32xf32>
    %131 = arith.negf %130 : vector<8x32xf32>
    %132 = math.exp %131 : vector<8x32xf32>
    %cst_47 = arith.constant 1.000000e+00 : f32
    %133 = vector.broadcast %cst_47 : f32 to vector<8x32xf32>
    %134 = arith.addf %133, %132 : vector<8x32xf32>
    %135 = arith.divf %133, %134 : vector<8x32xf32>
    %136 = vector.extract_strided_slice %119 {offsets = [0, 64], sizes = [8, 32], strides = [1, 1]} : vector<8x128xf32> to vector<8x32xf32>
    %137 = vector.extract_strided_slice %122 {offsets = [0, 64], sizes = [8, 32], strides = [1, 1]} : vector<8x128xf32> to vector<8x32xf32>
    %138 = arith.mulf %129, %137 : vector<8x32xf32>
    %139 = arith.addf %136, %138 : vector<8x32xf32>
    %140 = math.tanh %139 : vector<8x32xf32>
    %cst_48 = arith.constant 1.000000e+00 : f32
    %141 = vector.broadcast %cst_48 : f32 to vector<8x32xf32>
    %142 = arith.subf %141, %135 : vector<8x32xf32>
    %143 = arith.mulf %142, %140 : vector<8x32xf32>
    %144 = arith.mulf %135, %115 : vector<8x32xf32>
    %145 = arith.addf %143, %144 : vector<8x32xf32>
    %146 = arith.addi %0, %c3_i32 : i32
    %c8_i32_49 = arith.constant 8 : i32
    %147 = arith.cmpi slt, %146, %c8_i32_49 : i32
    %148 = arith.select %147, %145, %115 : vector<8x32xf32>
    %c4_i32_50 = arith.constant 4 : i32
    %c0_51 = arith.constant 0 : index
    %c0_52 = arith.constant 0 : index
    %c0_53 = arith.constant 0 : index
    %149 = vector.load %arg11[%c0_51, %c0_52, %c0_53] : memref<1x8x32xf32, #tpu.memory_space<vmem>>, vector<1x8x32xf32>
    %150 = vector.shape_cast %149 : vector<1x8x32xf32> to vector<8x32xf32>
    %151 = vector.shape_cast %148 : vector<8x32xf32> to vector<1x8x32xf32>
    tpu.vector_store %arg11[%c0_51, %c0_52, %c0_53], %151 {strides = array<i32>} : memref<1x8x32xf32, #tpu.memory_space<vmem>>, vector<1x8x32xf32>,
    %c1_i32_54 = arith.constant 1 : i32
    %152 = arith.cmpi eq, %arg1, %c1_i32_54 : i32
    %153 = arith.extui %152 : i1 to i32
    %c0_i32_55 = arith.constant 0 : i32
    %154 = arith.cmpi ne, %153, %c0_i32_55 : i32
    scf.if %154 {
      %c0_56 = arith.constant 0 : index
      %c0_57 = arith.constant 0 : index
      %155 = vector.load %arg8[%c0_56, %c0_57] : memref<32x2xf32, #tpu.memory_space<vmem>>, vector<32x2xf32>
      %cst_58 = arith.constant dense<0.000000e+00> : vector<8x2xf32>
      %156 = tpu.matmul %148, %155, %cst_58 {dimension_numbers = #tpu.dot_dimension_numbers<[1], [0], [0], [1], [0, 0, 1, 1], [], []>} : vector<8x32xf32>, vector<32x2xf32>, vector<8x2xf32> -> vector<8x2xf32>
      %c0_59 = arith.constant 0 : index
      %c0_60 = arith.constant 0 : index
      %157 = vector.load %arg9[%c0_59, %c0_60] : memref<1x2xf32, #tpu.memory_space<vmem>>, vector<1x2xf32>
      %158 = vector.broadcast %157 : vector<1x2xf32> to vector<8x2xf32>
      %159 = arith.addf %156, %158 : vector<8x2xf32>
      %c0_61 = arith.constant 0 : index
      %c0_62 = arith.constant 0 : index
      %160 = vector.load %arg10[%c0_61, %c0_62] : memref<8x2xf32, #tpu.memory_space<vmem>>, vector<8x2xf32>
      tpu.vector_store %arg10[%c0_61, %c0_62], %159 {strides = array<i32>} : memref<8x2xf32, #tpu.memory_space<vmem>>, vector<8x2xf32>,
    } else {
    }
    return
  }
  func.func @transform_0(%arg0: i32, %arg1: i32) -> (i32, i32, i32) {
    %c0_i32 = arith.constant 0 : i32
    %c0_i32_0 = arith.constant 0 : i32
    return %arg0, %arg1, %c0_i32 : i32, i32, i32
  }
  func.func @transform_1(%arg0: i32, %arg1: i32) -> (i32, i32, i32) {
    %c0_i32 = arith.constant 0 : i32
    %c0_i32_0 = arith.constant 0 : i32
    %c0_i32_1 = arith.constant 0 : i32
    return %c0_i32, %arg0, %c0_i32_0 : i32, i32, i32
  }
  func.func @transform_2(%arg0: i32, %arg1: i32) -> (i32, i32) {
    %c0_i32 = arith.constant 0 : i32
    %c0_i32_0 = arith.constant 0 : i32
    %c0_i32_1 = arith.constant 0 : i32
    return %c0_i32, %c0_i32_0 : i32, i32
  }
  func.func @transform_3(%arg0: i32, %arg1: i32) -> (i32, i32) {
    %c0_i32 = arith.constant 0 : i32
    %c0_i32_0 = arith.constant 0 : i32
    %c0_i32_1 = arith.constant 0 : i32
    return %c0_i32, %c0_i32_0 : i32, i32
  }
  func.func @transform_4(%arg0: i32, %arg1: i32) -> (i32, i32) {
    %c0_i32 = arith.constant 0 : i32
    %c0_i32_0 = arith.constant 0 : i32
    %c0_i32_1 = arith.constant 0 : i32
    return %c0_i32, %c0_i32_0 : i32, i32
  }
  func.func @transform_5(%arg0: i32, %arg1: i32) -> (i32, i32) {
    %c0_i32 = arith.constant 0 : i32
    %c0_i32_0 = arith.constant 0 : i32
    %c0_i32_1 = arith.constant 0 : i32
    return %c0_i32, %c0_i32_0 : i32, i32
  }
  func.func @transform_6(%arg0: i32, %arg1: i32) -> (i32, i32) {
    %c0_i32 = arith.constant 0 : i32
    %c0_i32_0 = arith.constant 0 : i32
    %c0_i32_1 = arith.constant 0 : i32
    return %c0_i32, %c0_i32_0 : i32, i32
  }
  func.func @transform_7(%arg0: i32, %arg1: i32) -> (i32, i32) {
    %c0_i32 = arith.constant 0 : i32
    %c0_i32_0 = arith.constant 0 : i32
    %c0_i32_1 = arith.constant 0 : i32
    return %c0_i32, %c0_i32_0 : i32, i32
  }
  func.func @transform_8(%arg0: i32, %arg1: i32) -> (i32, i32) {
    %c0_i32 = arith.constant 0 : i32
    %c0_i32_0 = arith.constant 0 : i32
    return %arg0, %c0_i32 : i32, i32
  }
  func.func @transform_9(%arg0: i32, %arg1: i32) -> (i32, i32, i32) {
    %c0_i32 = arith.constant 0 : i32
    %c0_i32_0 = arith.constant 0 : i32
    %c0_i32_1 = arith.constant 0 : i32
    return %c0_i32, %arg0, %c0_i32_0 : i32, i32, i32
  }
}

</mosaic_0001>

<llo_original>
// kernel: seq_gru_forward.1
$region0: #{seq_gru_forward.1}
  #allocation0 [shape = 'u32[]', space=smem, size = 0x4, offset = 0x4, fixed_abs, tag = 'smem constant byte address 0x4 - core index']
  #allocation1 [shape = 'u32[144,128]{1,0:T(1,128)}', space=vmem, size = 0x12000, scoped, tag = 'internal scratch']
  #allocation2 [shape = 'f32[32,128]{1,0:T(8,128)}', space=vmem, size = 0x4000, scoped, tag = 'scratch operand']
  %s0 = inlined_call_operand.vmem [shape: f32[1,64,4], index: 0, kind: input, shape index: {}]
  %s1 = inlined_call_operand.vmem [shape: f32[1,8,32], index: 1, kind: input, shape index: {}]
  %s2 = inlined_call_operand.vmem [shape: f32[4,128], index: 2, kind: input, shape index: {}]
  %s3 = inlined_call_operand.vmem [shape: f32[32,128], index: 3, kind: input, shape index: {}]
  %s4 = inlined_call_operand.vmem [shape: f32[1,128], index: 4, kind: input, shape index: {}]
  %s5 = inlined_call_operand.vmem [shape: f32[1,128], index: 5, kind: input, shape index: {}]
  %s6 = inlined_call_operand.vmem [shape: f32[32,2], index: 6, kind: input, shape index: {}]
  %s7 = inlined_call_operand.vmem [shape: f32[1,2], index: 7, kind: input, shape index: {}]
  %s8 = inlined_call_operand.vmem [shape: f32[8,2], index: 8, kind: output, shape index: {0}]
  %s9 = inlined_call_operand.vmem [shape: f32[1,8,32], index: 9, kind: output, shape index: {1}]
  %10 = xla_tuple %s8, %s9
  %s11 = sld [smem:[#allocation0]]
  $region81: #{seq_gru_forward.1} parent=0
    _
  %s13 = ssub.s32 1, %s11
  %s14 = scalar_select 0, %s13, %s11
  loop: start=0, step=1, limit=4
  $region2: #{seq_gru_forward.1} parent=0 // loop_pre_header
    _
  $region3: #{seq_gru_forward.1} parent=0 // loop_header
    %s16 = sphi 0, %s20
    %p17 = scmp.ge.s32.totalorder %s16, 4
    %s23 = sphi 0, %s35
    %s24 = sphi 0, %s31
    %s25 = sphi 0, %s23
    %s26 = sphi 0, %s24
    %s27 = sphi 0, %s25
    %s28 = sphi 0, %s26
    %s40 = sphi 0, %s42
    %s43 = sphi 0, %s40
    %s44 = sphi 0, %s43
    %s60 = sphi 0, %s44
    %s66 = sphi 0, %s68
    %s69 = sphi 0, %s66
    %s70 = sphi 0, %s69
    %s86 = sphi 0, %s70
    %s90 = sphi 0, %s90
    %s92 = sphi 0, %s90
    %s93 = sphi 0, %s92
    %s107 = sphi 0, %s93
    %s111 = sphi 0, %s111
    %s113 = sphi 0, %s111
    %s114 = sphi 0, %s113
    %s128 = sphi 0, %s114
    %s132 = sphi 0, %s132
    %s134 = sphi 0, %s132
    %s135 = sphi 0, %s134
    %s149 = sphi 0, %s135
    %s153 = sphi 0, %s153
    %s155 = sphi 0, %s153
    %s156 = sphi 0, %s155
    %s170 = sphi 0, %s156
    %s174 = sphi 0, %s174
    %s176 = sphi 0, %s174
    %s177 = sphi 0, %s176
    %s191 = sphi 0, %s177
    %s195 = sphi 0, %s195
    %s197 = sphi 0, %s195
    %s198 = sphi 0, %s197
    %s212 = sphi 0, %s198
    %s218 = sphi 0, %s220
    %s221 = sphi 0, %s218
    %s222 = sphi 0, %s221
    %s238 = sphi 0, %s222
    %s244 = sphi 0, %s246
    %s247 = sphi 0, %s244
    %s248 = sphi 0, %s247
    %s264 = sphi 0, %s248
  $region4: #{seq_gru_forward.1} parent=0 // loop_header_branch
    %19 = sbr.rel (%p17) target = $region8
  $region5: #{seq_gru_forward.1} parent=0 // loop_body
    %s21 = ssub.s32 %s16, 1
    %s22 = ssub.s32 %s16, 2
    %s29 = sadd.s32 1, %s24
    %p30 = scmp.ge.s32.totalorder %s29, 2
    %s31 = scalar_select %p30, 0, %s29
    %s32 = sadd.s32 1, %s23
    %s33 = scalar_select %p30, %s32, %s23
    %p34 = scmp.ge.s32.totalorder %s33, 1
    %s35 = scalar_select %p34, 0, %s33
    %s36 = ssub.s32 %s23, %s35
    %s37 = ssub.s32 %s24, %s31
    %s38 = sor.u32 %s36, %s37
    %p39 = scmp.eq.s32.totalorder %s38, 0
    %s41 = sadd.s32 %s40, 1
    %s42 = scalar_select %p39, %s40, %s41
    %p45 = pneg %p39
    %p46 = scmp.eq.s32.totalorder %s16, 1
    %p47 = por %p45, %p46
    %p48 = scmp.ne.s32.totalorder %s40, %s43
    %p49 = scmp.eq.s32.totalorder %s16, 0
    %p50 = por %p48, %p49
    %p51 = scmp.ne.s32.totalorder %s40, %s43
    %p52 = scmp.eq.s32.totalorder %s21, 1
    %p53 = por %p51, %p52
    %p54 = scmp.ne.s32.totalorder %s43, %s44
    %p55 = scmp.eq.s32.totalorder %s21, 0
    %p56 = por %p54, %p55
    %p57 = scmp.ne.s32.totalorder %s43, %s44
    %p58 = scmp.eq.s32.totalorder %s22, 1
    %p59 = por %p57, %p58
    %p61 = scmp.ne.s32.totalorder %s44, %s60
    %p62 = scmp.eq.s32.totalorder %s22, 0
    %p63 = por %p61, %p62
    %s64 = ssub.s32 %s23, %s35
    %p65 = scmp.eq.s32.totalorder %s64, 0
    %s67 = sadd.s32 %s66, 1
    %s68 = scalar_select %p65, %s66, %s67
    %p71 = pneg %p65
    %p72 = scmp.eq.s32.totalorder %s16, 1
    %p73 = por %p71, %p72
    %p74 = scmp.ne.s32.totalorder %s66, %s69
    %p75 = scmp.eq.s32.totalorder %s16, 0
    %p76 = por %p74, %p75
    %p77 = scmp.ne.s32.totalorder %s66, %s69
    %p78 = scmp.eq.s32.totalorder %s21, 1
    %p79 = por %p77, %p78
    %p80 = scmp.ne.s32.totalorder %s69, %s70
    %p81 = scmp.eq.s32.totalorder %s21, 0
    %p82 = por %p80, %p81
    %p83 = scmp.ne.s32.totalorder %s69, %s70
    %p84 = scmp.eq.s32.totalorder %s22, 1
    %p85 = por %p83, %p84
    %p87 = scmp.ne.s32.totalorder %s70, %s86
    %p88 = scmp.eq.s32.totalorder %s22, 0
    %p89 = por %p87, %p88
    %s91 = sadd.s32 %s90, 1
    %p94 = scmp.eq.s32.totalorder %s16, 1
    %p95 = scmp.ne.s32.totalorder %s90, %s92
    %p96 = scmp.eq.s32.totalorder %s16, 0
    %p97 = por %p95, %p96
    %p98 = scmp.ne.s32.totalorder %s90, %s92
    %p99 = scmp.eq.s32.totalorder %s21, 1
    %p100 = por %p98, %p99
    %p101 = scmp.ne.s32.totalorder %s92, %s93
    %p102 = scmp.eq.s32.totalorder %s21, 0
    %p103 = por %p101, %p102
    %p104 = scmp.ne.s32.totalorder %s92, %s93
    %p105 = scmp.eq.s32.totalorder %s22, 1
    %p106 = por %p104, %p105
    %p108 = scmp.ne.s32.totalorder %s93, %s107
    %p109 = scmp.eq.s32.totalorder %s22, 0
    %p110 = por %p108, %p109
    %s112 = sadd.s32 %s111, 1
    %p115 = scmp.eq.s32.totalorder %s16, 1
    %p116 = scmp.ne.s32.totalorder %s111, %s113
    %p117 = scmp.eq.s32.totalorder %s16, 0
    %p118 = por %p116, %p117
    %p119 = scmp.ne.s32.totalorder %s111, %s113
    %p120 = scmp.eq.s32.totalorder %s21, 1
    %p121 = por %p119, %p120
    %p122 = scmp.ne.s32.totalorder %s113, %s114
    %p123 = scmp.eq.s32.totalorder %s21, 0
    %p124 = por %p122, %p123
    %p125 = scmp.ne.s32.totalorder %s113, %s114
    %p126 = scmp.eq.s32.totalorder %s22, 1
    %p127 = por %p125, %p126
    %p129 = scmp.ne.s32.totalorder %s114, %s128
    %p130 = scmp.eq.s32.totalorder %s22, 0
    %p131 = por %p129, %p130
    %s133 = sadd.s32 %s132, 1
    %p136 = scmp.eq.s32.totalorder %s16, 1
    %p137 = scmp.ne.s32.totalorder %s132, %s134
    %p138 = scmp.eq.s32.totalorder %s16, 0
    %p139 = por %p137, %p138
    %p140 = scmp.ne.s32.totalorder %s132, %s134
    %p141 = scmp.eq.s32.totalorder %s21, 1
    %p142 = por %p140, %p141
    %p143 = scmp.ne.s32.totalorder %s134, %s135
    %p144 = scmp.eq.s32.totalorder %s21, 0
    %p145 = por %p143, %p144
    %p146 = scmp.ne.s32.totalorder %s134, %s135
    %p147 = scmp.eq.s32.totalorder %s22, 1
    %p148 = por %p146, %p147
    %p150 = scmp.ne.s32.totalorder %s135, %s149
    %p151 = scmp.eq.s32.totalorder %s22, 0
    %p152 = por %p150, %p151
    %s154 = sadd.s32 %s153, 1
    %p157 = scmp.eq.s32.totalorder %s16, 1
    %p158 = scmp.ne.s32.totalorder %s153, %s155
    %p159 = scmp.eq.s32.totalorder %s16, 0
    %p160 = por %p158, %p159
    %p161 = scmp.ne.s32.totalorder %s153, %s155
    %p162 = scmp.eq.s32.totalorder %s21, 1
    %p163 = por %p161, %p162
    %p164 = scmp.ne.s32.totalorder %s155, %s156
    %p165 = scmp.eq.s32.totalorder %s21, 0
    %p166 = por %p164, %p165
    %p167 = scmp.ne.s32.totalorder %s155, %s156
    %p168 = scmp.eq.s32.totalorder %s22, 1
    %p169 = por %p167, %p168
    %p171 = scmp.ne.s32.totalorder %s156, %s170
    %p172 = scmp.eq.s32.totalorder %s22, 0
    %p173 = por %p171, %p172
    %s175 = sadd.s32 %s174, 1
    %p178 = scmp.eq.s32.totalorder %s16, 1
    %p179 = scmp.ne.s32.totalorder %s174, %s176
    %p180 = scmp.eq.s32.totalorder %s16, 0
    %p181 = por %p179, %p180
    %p182 = scmp.ne.s32.totalorder %s174, %s176
    %p183 = scmp.eq.s32.totalorder %s21, 1
    %p184 = por %p182, %p183
    %p185 = scmp.ne.s32.totalorder %s176, %s177
    %p186 = scmp.eq.s32.totalorder %s21, 0
    %p187 = por %p185, %p186
    %p188 = scmp.ne.s32.totalorder %s176, %s177
    %p189 = scmp.eq.s32.totalorder %s22, 1
    %p190 = por %p188, %p189
    %p192 = scmp.ne.s32.totalorder %s177, %s191
    %p193 = scmp.eq.s32.totalorder %s22, 0
    %p194 = por %p192, %p193
    %s196 = sadd.s32 %s195, 1
    %p199 = scmp.eq.s32.totalorder %s16, 1
    %p200 = scmp.ne.s32.totalorder %s195, %s197
    %p201 = scmp.eq.s32.totalorder %s16, 0
    %p202 = por %p200, %p201
    %p203 = scmp.ne.s32.totalorder %s195, %s197
    %p204 = scmp.eq.s32.totalorder %s21, 1
    %p205 = por %p203, %p204
    %p206 = scmp.ne.s32.totalorder %s197, %s198
    %p207 = scmp.eq.s32.totalorder %s21, 0
    %p208 = por %p206, %p207
    %p209 = scmp.ne.s32.totalorder %s197, %s198
    %p210 = scmp.eq.s32.totalorder %s22, 1
    %p211 = por %p209, %p210
    %p213 = scmp.ne.s32.totalorder %s198, %s212
    %p214 = scmp.eq.s32.totalorder %s22, 0
    %p215 = por %p213, %p214
    %s216 = ssub.s32 %s23, %s35
    %p217 = scmp.eq.s32.totalorder %s216, 0
    %s219 = sadd.s32 %s218, 1
    %s220 = scalar_select %p217, %s218, %s219
    %p223 = pneg %p217
    %p224 = scmp.eq.s32.totalorder %s16, 1
    %p225 = por %p223, %p224
    %p226 = scmp.ne.s32.totalorder %s218, %s221
    %p227 = scmp.eq.s32.totalorder %s16, 0
    %p228 = por %p226, %p227
    %p229 = scmp.ne.s32.totalorder %s218, %s221
    %p230 = scmp.eq.s32.totalorder %s21, 1
    %p231 = por %p229, %p230
    %p232 = scmp.ne.s32.totalorder %s221, %s222
    %p233 = scmp.eq.s32.totalorder %s21, 0
    %p234 = por %p232, %p233
    %p235 = scmp.ne.s32.totalorder %s221, %s222
    %p236 = scmp.eq.s32.totalorder %s22, 1
    %p237 = por %p235, %p236
    %p239 = scmp.ne.s32.totalorder %s222, %s238
    %p240 = scmp.eq.s32.totalorder %s22, 0
    %p241 = por %p239, %p240
    %s242 = ssub.s32 %s23, %s35
    %p243 = scmp.eq.s32.totalorder %s242, 0
    %s245 = sadd.s32 %s244, 1
    %s246 = scalar_select %p243, %s244, %s245
    %p249 = pneg %p243
    %p250 = scmp.eq.s32.totalorder %s16, 1
    %p251 = por %p249, %p250
    %p252 = scmp.ne.s32.totalorder %s244, %s247
    %p253 = scmp.eq.s32.totalorder %s16, 0
    %p254 = por %p252, %p253
    %p255 = scmp.ne.s32.totalorder %s244, %s247
    %p256 = scmp.eq.s32.totalorder %s21, 1
    %p257 = por %p255, %p256
    %p258 = scmp.ne.s32.totalorder %s247, %s248
    %p259 = scmp.eq.s32.totalorder %s21, 0
    %p260 = por %p258, %p259
    %p261 = scmp.ne.s32.totalorder %s247, %s248
    %p262 = scmp.eq.s32.totalorder %s22, 1
    %p263 = por %p261, %p262
    %p265 = scmp.ne.s32.totalorder %s248, %s264
    %p266 = scmp.eq.s32.totalorder %s22, 0
    %p267 = por %p265, %p266
    %p268 = scmp.le.s32.totalorder 1, %s16
    %p269 = scmp.lt.s32.totalorder %s16, 3
    %p270 = pnand %p268, %p269
    %p271 = pneg %p270
    // Predicated region
    $region9: #{seq_gru_forward.1} parent=5 // pred_check
      _
    $region10: #{seq_gru_forward.1} parent=5 // pred_check_branch
      %273 = sbr.rel (%p270) target = $region12
    $region11: #{seq_gru_forward.1} parent=5 // pred_region
      %s274 = ssub.s32 %s16, 1
      // Predicated region
      $region13: #{seq_gru_forward.1} parent=11 // pred_check
        %p275 = pneg %p82
      $region14: #{seq_gru_forward.1} parent=11 // pred_check_branch
        %277 = sbr.rel (%p275) target = $region16
      $region15: #{seq_gru_forward.1} parent=11 // pred_region
        %p278 = scmp.lt.s32.totalorder %s25, 0
        %s279 = scalar_select %p278, %s25, 0
        %s280 = smul.addr %s279, 8
        %s281 = scalar_lea.vmem %s1, %s280
      $region16: #{seq_gru_forward.1} parent=11 // pred_fallthru
        _
      // Predicated region
      $region17: #{seq_gru_forward.1} parent=11 // pred_check
        %p282 = pneg %p103
      $region18: #{seq_gru_forward.1} parent=11 // pred_check_branch
        %284 = sbr.rel (%p282) target = $region20
      $region19: #{seq_gru_forward.1} parent=11 // pred_region
        _
      $region20: #{seq_gru_forward.1} parent=11 // pred_fallthru
        _
      // Predicated region
      $region21: #{seq_gru_forward.1} parent=11 // pred_check
        %p285 = pneg %p124
      $region22: #{seq_gru_forward.1} parent=11 // pred_check_branch
        %287 = sbr.rel (%p285) target = $region24
      $region23: #{seq_gru_forward.1} parent=11 // pred_region
        _
      $region24: #{seq_gru_forward.1} parent=11 // pred_fallthru
        _
      // Predicated region
      $region25: #{seq_gru_forward.1} parent=11 // pred_check
        %p288 = pneg %p145
      $region26: #{seq_gru_forward.1} parent=11 // pred_check_branch
        %290 = sbr.rel (%p288) target = $region28
      $region27: #{seq_gru_forward.1} parent=11 // pred_region
        _
      $region28: #{seq_gru_forward.1} parent=11 // pred_fallthru
        _
      // Predicated region
      $region29: #{seq_gru_forward.1} parent=11 // pred_check
        %p291 = pneg %p166
      $region30: #{seq_gru_forward.1} parent=11 // pred_check_branch
        %293 = sbr.rel (%p291) target = $region32
      $region31: #{seq_gru_forward.1} parent=11 // pred_region
        _
      $region32: #{seq_gru_forward.1} parent=11 // pred_fallthru
        _
      // Predicated region
      $region33: #{seq_gru_forward.1} parent=11 // pred_check
        %p294 = pneg %p187
      $region34: #{seq_gru_forward.1} parent=11 // pred_check_branch
        %296 = sbr.rel (%p294) target = $region36
      $region35: #{seq_gru_forward.1} parent=11 // pred_region
        _
      $region36: #{seq_gru_forward.1} parent=11 // pred_fallthru
        _
      // Predicated region
      $region37: #{seq_gru_forward.1} parent=11 // pred_check
        %p297 = pneg %p208
      $region38: #{seq_gru_forward.1} parent=11 // pred_check_branch
        %299 = sbr.rel (%p297) target = $region40
      $region39: #{seq_gru_forward.1} parent=11 // pred_region
        _
      $region40: #{seq_gru_forward.1} parent=11 // pred_fallthru
        _
    $region12: #{seq_gru_forward.1} parent=5 // pred_fallthru
      _
    %p300 = scmp.lt.s32.totalorder %s16, 2
    // Predicated region
    $region41: #{seq_gru_forward.1} parent=5 // pred_check
      %p301 = pneg %p300
    $region42: #{seq_gru_forward.1} parent=5 // pred_check_branch
      %303 = sbr.rel (%p301) target = $region44
    $region43: #{seq_gru_forward.1} parent=5 // pred_region
      // Predicated region
      $region45: #{seq_gru_forward.1} parent=43 // pred_check
        %p304 = pneg %p50
      $region46: #{seq_gru_forward.1} parent=43 // pred_check_branch
        %306 = sbr.rel (%p304) target = $region48
      $region47: #{seq_gru_forward.1} parent=43 // pred_region
        %s307 = smul.u32 4, %s24
        %p308 = scmp.lt.s32.totalorder %s23, 0
        %s309 = scalar_select %p308, %s23, 0
        %p310 = scmp.lt.s32.totalorder %s307, 7
        %s311 = scalar_select %p310, %s307, 7
        %s312 = smul.addr %s309, 8
        %s313 = sadd.s32 %s311, %s312
        %s314 = smul.addr %s313, 8
        %s315 = scalar_lea.vmem %s0, %s314
        %s316 = smul.u32 4, %s24
      $region48: #{seq_gru_forward.1} parent=43 // pred_fallthru
        _
    $region44: #{seq_gru_forward.1} parent=5 // pred_fallthru
      _
    %p317 = scmp.le.s32.totalorder 1, %s16
    %p318 = scmp.lt.s32.totalorder %s16, 3
    %p319 = pnand %p317, %p318
    %p320 = pneg %p319
    // Predicated region
    $region49: #{seq_gru_forward.1} parent=5 // pred_check
      _
    $region50: #{seq_gru_forward.1} parent=5 // pred_check_branch
      %322 = sbr.rel (%p319) target = $region52
    $region51: #{seq_gru_forward.1} parent=5 // pred_region
      %s323 = ssub.s32 %s16, 1
      %s324 = smul.u32 4, %s26
      %p325 = scmp.lt.s32.totalorder %s25, 0
      %s326 = scalar_select %p325, %s25, 0
      %p327 = scmp.lt.s32.totalorder %s324, 7
      %s328 = scalar_select %p327, %s324, 7
      %s329 = smul.addr %s326, 8
      %s330 = sadd.s32 %s328, %s329
      %s331 = smul.addr %s330, 8
      %s332 = scalar_lea.vmem %s0, %s331
      %p333 = pneg %p56
      %p334 = pneg %p53
      %p335 = scmp.lt.s32.totalorder %s25, 0
      %s336 = scalar_select %p335, %s25, 0
      %s337 = smul.addr %s336, 8
      %s338 = scalar_lea.vmem %s1, %s337
      %p339 = pneg %p82
      %p340 = pneg %p79
      %p341 = pneg %p103
      %p342 = pneg %p100
      %p343 = pneg %p124
      %p344 = pneg %p121
      %p345 = pneg %p145
      %p346 = pneg %p142
      %p347 = pneg %p166
      %p348 = pneg %p163
      %p349 = pneg %p187
      %p350 = pneg %p184
      %p351 = pneg %p208
      %p352 = pneg %p205
      %p353 = pneg %p234
      %p354 = pneg %p231
      %p355 = scmp.lt.s32.totalorder %s25, 0
      %s356 = scalar_select %p355, %s25, 0
      %s357 = smul.addr %s356, 8
      %s358 = scalar_lea.vmem %s8, %s357
      %p359 = pneg %p260
      %p360 = pneg %p257
      %p361 = scmp.lt.s32.totalorder %s25, 0
      %s362 = scalar_select %p361, %s25, 0
      %s363 = smul.addr %s362, 8
      %s364 = scalar_lea.vmem %s9, %s363
      %s365 = smul.u32 4, %s26
      %p366 = scmp.lt.s32.totalorder %s25, 0
      %s367 = scalar_select %p366, %s25, 0
      %p368 = scmp.lt.s32.totalorder %s365, 7
      %s369 = scalar_select %p368, %s365, 7
      %s370 = smul.addr %s367, 8
      %s371 = sadd.s32 %s369, %s370
      %s372 = smul.addr %s371, 8
      %s373 = scalar_lea.vmem %s0, %s372
      %s374 = smul.u32 4, %s26
      %p375 = scmp.lt.s32.totalorder %s25, 0
      %s376 = scalar_select %p375, %s25, 0
      %s377 = smul.addr %s376, 8
      %s378 = scalar_lea.vmem %s1, %s377
      %p379 = scmp.lt.s32.totalorder %s25, 0
      %s380 = scalar_select %p379, %s25, 0
      %s381 = smul.addr %s380, 8
      %s382 = scalar_lea.vmem %s8, %s381
      %p383 = scmp.lt.s32.totalorder %s25, 0
      %s384 = scalar_select %p383, %s25, 0
      %s385 = smul.addr %s384, 8
      %s386 = scalar_lea.vmem %s9, %s385
      %s387 = smul.u32 %s26, 4
      %p388 = scmp.eq.s32.totalorder %s26, 0
      // Predicated region
      $region53: #{seq_gru_forward.1} parent=51 // pred_check
        %p389 = pneg %p388
      $region54: #{seq_gru_forward.1} parent=51 // pred_check_branch
        %391 = sbr.rel (%p389) target = $region56
      $region55: #{seq_gru_forward.1} parent=51 // pred_region
        %v392 = vld [vmem:[%s378] sm:$0xff]
        %vm393 = vcmask 261120
        %394 = vst.msk [vmem:[%s386] sm:$0xff] %vm393, %v392
      $region56: #{seq_gru_forward.1} parent=51 // pred_fallthru
        _
      %v395 = vld [vmem:[%s373] sm:$0xff]
      %v396 = vld [vmem:[%s373 + $0x8] sm:$0xff]
      %v397 = vld [vmem:[%s373 + $0x10] sm:$0xff]
      %v398 = vld [vmem:[%s373 + $0x18] sm:$0xff]
      %v399 = vld [vmem:[%s2] sm:$0xf]
      %v400 = vld [vmem:[%s4] sm:$0x1]
      %v402 = vlaneseq
      %v403 = vshrl.u32 %v402, 7
      %v404 = vsub.s32 0, %v403
      %v405 = vrot.slane %v400, %v404
      %vm407 = vcmask 31744
      %v409 = vsel %vm407, %v395, 0
      %v412 = vsel %vm407, %v396, 0
      %v415 = vsel %vm407, %v397, 0
      %v418 = vsel %vm407, %v398, 0
      %vm420 = vcmask 1043456
      %v422 = vsel %vm420, %v399, 0
      %424 = vmatprep.subr.mxu0 0.0
      %425 = vmatpush1.msra.mxu0 %v422
      %426 = vmatprep.subr.mxu0 0.0
      %427 = vmatpush1.msra.mxu0 0.0
      %428 = vmatprep.subr.mxu0 0.0
      %429 = vmatpush1.msra.mxu0 0.0
      %430 = vmatprep.subr.mxu0 0.0
      %431 = vmatpush1.msra.mxu0 0.0
      %432 = vmatprep.subr.mxu0 0.0
      %433 = vmatpush1.msra.mxu0 0.0
      %434 = vmatprep.subr.mxu0 0.0
      %435 = vmatpush1.msra.mxu0 0.0
      %436 = vmatprep.subr.mxu0 0.0
      %437 = vmatpush1.msra.mxu0 0.0
      %438 = vmatprep.subr.mxu0 0.0
      %439 = vmatpush1.msra.mxu0 0.0
      %440 = vmatprep.subr.mxu0 0.0
      %441 = vmatpush1.msra.mxu0 0.0
      %442 = vmatprep.subr.mxu0 0.0
      %443 = vmatpush1.msra.mxu0 0.0
      %444 = vmatprep.subr.mxu0 0.0
      %445 = vmatpush1.msra.mxu0 0.0
      %446 = vmatprep.subr.mxu0 0.0
      %447 = vmatpush1.msra.mxu0 0.0
      %448 = vmatprep.subr.mxu0 0.0
      %449 = vmatpush1.msra.mxu0 0.0
      %450 = vmatprep.subr.mxu0 0.0
      %451 = vmatpush1.msra.mxu0 0.0
      %452 = vmatprep.subr.mxu0 0.0
      %453 = vmatpush1.msra.mxu0 0.0
      %454 = vmatprep.subr.mxu0 0.0
      %455 = vmatpush1.msra.mxu0 0.0
      %456 = vmatprep.subr.mxu0 0.0
      %457 = vmatpush1.msra.mxu0 0.0
      %458 = vmatprep.subr.mxu0 0.0
      %459 = vmatpush1.msra.mxu0 0.0
      %460 = vmatprep.subr.mxu0 0.0
      %461 = vmatpush1.msra.mxu0 0.0
      %462 = vmatprep.subr.mxu0 0.0
      %463 = vmatpush1.msra.mxu0 0.0
      %464 = vmatprep.subr.mxu0 0.0
      %465 = vmatpush1.msra.mxu0 0.0
      %466 = vmatprep.subr.mxu0 0.0
      %467 = vmatpush1.msra.mxu0 0.0
      %468 = vmatprep.subr.mxu0 0.0
      %469 = vmatpush1.msra.mxu0 0.0
      %470 = vmatprep.subr.mxu0 0.0
      %471 = vmatpush1.msra.mxu0 0.0
      %472 = vmatprep.subr.mxu0 0.0
      %473 = vmatpush1.msra.mxu0 0.0
      %474 = vmatprep.subr.mxu0 0.0
      %475 = vmatpush1.msra.mxu0 0.0
      %476 = vmatprep.subr.mxu0 0.0
      %477 = vmatpush1.msra.mxu0 0.0
      %478 = vmatprep.subr.mxu0 0.0
      %479 = vmatpush1.msra.mxu0 0.0
      %480 = vmatprep.subr.mxu0 0.0
      %481 = vmatpush1.msra.mxu0 0.0
      %482 = vmatprep.subr.mxu0 0.0
      %483 = vmatpush1.msra.mxu0 0.0
      %484 = vmatprep.subr.mxu0 0.0
      %485 = vmatpush1.msra.mxu0 0.0
      %486 = vmatprep.subr.mxu0 0.0
      %487 = vmatpush1.msra.mxu0 0.0
      %488 = vmatprep.mubr.f32.mxu0 0.0
      %489 = vmatmul.mubr.f32.gmra.mrb[0].mxu0 %v409
      %v490 = vpop.f32.mrb[0].mxu0
      %v491 = vadd.f32 %v405, %v490
      %v492 = vpop.f32.mrb[0].mxu0
      %493 = vmatprep.mubr.f32.mxu0 0.0
      %494 = vmatmul.mubr.f32.gmra.mrb[0].mxu0 %v412
      %v495 = vpop.f32.mrb[0].mxu0
      %v496 = vadd.f32 %v405, %v495
      %v497 = vpop.f32.mrb[0].mxu0
      %498 = vmatprep.mubr.f32.mxu0 0.0
      %499 = vmatmul.mubr.f32.gmra.mrb[0].mxu0 %v415
      %v500 = vpop.f32.mrb[0].mxu0
      %v501 = vadd.f32 %v405, %v500
      %v502 = vpop.f32.mrb[0].mxu0
      %503 = vmatprep.mubr.f32.mxu0 0.0
      %504 = vmatmul.mubr.f32.gmra.mrb[0].mxu0 %v418
      %v505 = vpop.f32.mrb[0].mxu0
      %v506 = vadd.f32 %v405, %v505
      %v507 = vpop.f32.mrb[0].mxu0
      %508 = vdwg.mxu0
      %509 = vst [vmem:[#allocation2] sm:$0xff] %v491
      %510 = vst [vmem:[#allocation2 + $0x8] sm:$0xff] %v496
      %511 = vst [vmem:[#allocation2 + $0x10] sm:$0xff] %v501
      %512 = vst [vmem:[#allocation2 + $0x18] sm:$0xff] %v506
      %v513 = vld [vmem:[%s5] sm:$0x1]
      %v515 = vlaneseq
      %v516 = vshrl.u32 %v515, 7
      %v517 = vsub.s32 0, %v516
      %v518 = vrot.slane %v513, %v517
      %v520 = vld [vmem:[%s386] sm:$0xff]
      %v521 = vld [vmem:[#allocation2] sm:$0xff]
      %v522 = vld [vmem:[%s3] sm:$0xff]
      %v523 = vld [vmem:[%s3 + $0x8] sm:$0xff]
      %v524 = vld [vmem:[%s3 + $0x10] sm:$0xff]
      %v525 = vld [vmem:[%s3 + $0x18] sm:$0xff]
      %vm526 = vcmask 261120
      %v528 = vsel %vm526, %v520, 0
      %530 = vmatprep.subr.mxu0 0.0
      %531 = vmatpush1.msra.mxu0 %v522
      %532 = vmatprep.subr.mxu0 0.0
      %533 = vmatpush1.msra.mxu0 %v523
      %534 = vmatprep.subr.mxu0 0.0
      %535 = vmatpush1.msra.mxu0 %v524
      %536 = vmatprep.subr.mxu0 0.0
      %537 = vmatpush1.msra.mxu0 %v525
      %538 = vmatprep.subr.mxu0 0.0
      %539 = vmatpush1.msra.mxu0 0.0
      %540 = vmatprep.subr.mxu0 0.0
      %541 = vmatpush1.msra.mxu0 0.0
      %542 = vmatprep.subr.mxu0 0.0
      %543 = vmatpush1.msra.mxu0 0.0
      %544 = vmatprep.subr.mxu0 0.0
      %545 = vmatpush1.msra.mxu0 0.0
      %546 = vmatprep.subr.mxu0 0.0
      %547 = vmatpush1.msra.mxu0 0.0
      %548 = vmatprep.subr.mxu0 0.0
      %549 = vmatpush1.msra.mxu0 0.0
      %550 = vmatprep.subr.mxu0 0.0
      %551 = vmatpush1.msra.mxu0 0.0
      %552 = vmatprep.subr.mxu0 0.0
      %553 = vmatpush1.msra.mxu0 0.0
      %554 = vmatprep.subr.mxu0 0.0
      %555 = vmatpush1.msra.mxu0 0.0
      %556 = vmatprep.subr.mxu0 0.0
      %557 = vmatpush1.msra.mxu0 0.0
      %558 = vmatprep.subr.mxu0 0.0
      %559 = vmatpush1.msra.mxu0 0.0
      %560 = vmatprep.subr.mxu0 0.0
      %561 = vmatpush1.msra.mxu0 0.0
      %562 = vmatprep.subr.mxu0 0.0
      %563 = vmatpush1.msra.mxu0 0.0
      %564 = vmatprep.subr.mxu0 0.0
      %565 = vmatpush1.msra.mxu0 0.0
      %566 = vmatprep.subr.mxu0 0.0
      %567 = vmatpush1.msra.mxu0 0.0
      %568 = vmatprep.subr.mxu0 0.0
      %569 = vmatpush1.msra.mxu0 0.0
      %570 = vmatprep.subr.mxu0 0.0
      %571 = vmatpush1.msra.mxu0 0.0
      %572 = vmatprep.subr.mxu0 0.0
      %573 = vmatpush1.msra.mxu0 0.0
      %574 = vmatprep.subr.mxu0 0.0
      %575 = vmatpush1.msra.mxu0 0.0
      %576 = vmatprep.subr.mxu0 0.0
      %577 = vmatpush1.msra.mxu0 0.0
      %578 = vmatprep.subr.mxu0 0.0
      %579 = vmatpush1.msra.mxu0 0.0
      %580 = vmatprep.subr.mxu0 0.0
      %581 = vmatpush1.msra.mxu0 0.0
      %582 = vmatprep.subr.mxu0 0.0
      %583 = vmatpush1.msra.mxu0 0.0
      %584 = vmatprep.subr.mxu0 0.0
      %585 = vmatpush1.msra.mxu0 0.0
      %586 = vmatprep.subr.mxu0 0.0
      %587 = vmatpush1.msra.mxu0 0.0
      %588 = vmatprep.subr.mxu0 0.0
      %589 = vmatpush1.msra.mxu0 0.0
      %590 = vmatprep.subr.mxu0 0.0
      %591 = vmatpush1.msra.mxu0 0.0
      %592 = vmatprep.subr.mxu0 0.0
      %593 = vmatpush1.msra.mxu0 0.0
      %594 = vmatprep.mubr.f32.mxu0 0.0
      %595 = vmatmul.mubr.f32.gmra.mrb[0].mxu0 %v528
      %v596 = vpop.f32.mrb[0].mxu0
      %v597 = vadd.f32 %v518, %v596
      %v598 = vpop.f32.mrb[0].mxu0
      %599 = vdwg.mxu0
      %v600 = vadd.f32 %v521, %v597
      %v601 = vxor.u32 %v600, 2147483648
      %v602 = vmul.f32 %v601, 1.442695
      %v603 = vpow.pop %v602
      %v604 = vadd.f32 %v603, 1.0
      %v605 = vrcp.pop %v604
      %v606 = vmul.f32 1.0, %v605
      %608 = vrot.lane.b32.xlu0 %v597, 64
      %v609 = vpop.permute.xlu0 %608
      %v611 = vmul.f32 %v606, %v609
      %613 = vrot.lane.b32.xlu0 %v611, 64
      %v614 = vpop.permute.xlu0 %613
      %v616 = vadd.f32 %v521, %v614
      %v617 = vtanh.pop %v616
      %v618 = vsub.f32 1.0, %v606
      %620 = vrot.lane.b32.xlu0 %v617, 96
      %v621 = vpop.permute.xlu0 %620
      %v623 = vmul.f32 %v618, %v621
      %624 = vrot.lane.b32.xlu0 %v520, 32
      %v625 = vpop.permute.xlu0 %624
      %v627 = vmul.f32 %v606, %v625
      %v628 = vadd.f32 %v623, %v627
      %p629 = scmp.lt.s32.totalorder %s387, 8
      %s630 = scalar_select %p629, 1, 0
      %v631 = vstv %s630
      %vm632 = vcmp.eq.s32.totalorder %v631, 1
      %v633 = vsel %vm632, %v628, %v625
      %s634 = scalar_lea.vmem [#allocation2], 8
      %v635 = vld [vmem:[%s634] sm:$0xff]
      %637 = vrot.lane.b32.xlu0 %v633, 96
      %v638 = vpop.permute.xlu0 %637
      %v639 = vsel %vm526, %v638, 0
      %641 = vmatprep.subr.mxu0 0.0
      %642 = vmatpush1.msra.mxu0 %v522
      %643 = vmatprep.subr.mxu0 0.0
      %644 = vmatpush1.msra.mxu0 %v523
      %645 = vmatprep.subr.mxu0 0.0
      %646 = vmatpush1.msra.mxu0 %v524
      %647 = vmatprep.subr.mxu0 0.0
      %648 = vmatpush1.msra.mxu0 %v525
      %649 = vmatprep.subr.mxu0 0.0
      %650 = vmatpush1.msra.mxu0 0.0
      %651 = vmatprep.subr.mxu0 0.0
      %652 = vmatpush1.msra.mxu0 0.0
      %653 = vmatprep.subr.mxu0 0.0
      %654 = vmatpush1.msra.mxu0 0.0
      %655 = vmatprep.subr.mxu0 0.0
      %656 = vmatpush1.msra.mxu0 0.0
      %657 = vmatprep.subr.mxu0 0.0
      %658 = vmatpush1.msra.mxu0 0.0
      %659 = vmatprep.subr.mxu0 0.0
      %660 = vmatpush1.msra.mxu0 0.0
      %661 = vmatprep.subr.mxu0 0.0
      %662 = vmatpush1.msra.mxu0 0.0
      %663 = vmatprep.subr.mxu0 0.0
      %664 = vmatpush1.msra.mxu0 0.0
      %665 = vmatprep.subr.mxu0 0.0
      %666 = vmatpush1.msra.mxu0 0.0
      %667 = vmatprep.subr.mxu0 0.0
      %668 = vmatpush1.msra.mxu0 0.0
      %669 = vmatprep.subr.mxu0 0.0
      %670 = vmatpush1.msra.mxu0 0.0
      %671 = vmatprep.subr.mxu0 0.0
      %672 = vmatpush1.msra.mxu0 0.0
      %673 = vmatprep.subr.mxu0 0.0
      %674 = vmatpush1.msra.mxu0 0.0
      %675 = vmatprep.subr.mxu0 0.0
      %676 = vmatpush1.msra.mxu0 0.0
      %677 = vmatprep.subr.mxu0 0.0
      %678 = vmatpush1.msra.mxu0 0.0
      %679 = vmatprep.subr.mxu0 0.0
      %680 = vmatpush1.msra.mxu0 0.0
      %681 = vmatprep.subr.mxu0 0.0
      %682 = vmatpush1.msra.mxu0 0.0
      %683 = vmatprep.subr.mxu0 0.0
      %684 = vmatpush1.msra.mxu0 0.0
      %685 = vmatprep.subr.mxu0 0.0
      %686 = vmatpush1.msra.mxu0 0.0
      %687 = vmatprep.subr.mxu0 0.0
      %688 = vmatpush1.msra.mxu0 0.0
      %689 = vmatprep.subr.mxu0 0.0
      %690 = vmatpush1.msra.mxu0 0.0
      %691 = vmatprep.subr.mxu0 0.0
      %692 = vmatpush1.msra.mxu0 0.0
      %693 = vmatprep.subr.mxu0 0.0
      %694 = vmatpush1.msra.mxu0 0.0
      %695 = vmatprep.subr.mxu0 0.0
      %696 = vmatpush1.msra.mxu0 0.0
      %697 = vmatprep.subr.mxu0 0.0
      %698 = vmatpush1.msra.mxu0 0.0
      %699 = vmatprep.subr.mxu0 0.0
      %700 = vmatpush1.msra.mxu0 0.0
      %701 = vmatprep.subr.mxu0 0.0
      %702 = vmatpush1.msra.mxu0 0.0
      %703 = vmatprep.subr.mxu0 0.0
      %704 = vmatpush1.msra.mxu0 0.0
      %705 = vmatprep.mubr.f32.mxu0 0.0
      %706 = vmatmul.mubr.f32.gmra.mrb[0].mxu0 %v639
      %v707 = vpop.f32.mrb[0].mxu0
      %v708 = vadd.f32 %v518, %v707
      %v709 = vpop.f32.mrb[0].mxu0
      %710 = vdwg.mxu0
      %v711 = vadd.f32 %v635, %v708
      %v712 = vxor.u32 %v711, 2147483648
      %v713 = vmul.f32 %v712, 1.442695
      %v714 = vpow.pop %v713
      %v715 = vadd.f32 %v714, 1.0
      %v716 = vrcp.pop %v715
      %v717 = vmul.f32 1.0, %v716
      %719 = vrot.lane.b32.xlu0 %v708, 64
      %v720 = vpop.permute.xlu0 %719
      %v722 = vmul.f32 %v717, %v720
      %724 = vrot.lane.b32.xlu0 %v722, 64
      %v725 = vpop.permute.xlu0 %724
      %v727 = vadd.f32 %v635, %v725
      %v728 = vtanh.pop %v727
      %v729 = vsub.f32 1.0, %v717
      %731 = vrot.lane.b32.xlu0 %v728, 96
      %v732 = vpop.permute.xlu0 %731
      %v734 = vmul.f32 %v729, %v732
      %v735 = vmul.f32 %v717, %v633
      %v736 = vadd.f32 %v734, %v735
      %s737 = sadd.s32 %s387, 1
      %p738 = scmp.lt.s32.totalorder %s737, 8
      %s739 = scalar_select %p738, 1, 0
      %v740 = vstv %s739
      %vm741 = vcmp.eq.s32.totalorder %v740, 1
      %v742 = vsel %vm741, %v736, %v633
      %s743 = scalar_lea.vmem [#allocation2], 16
      %v744 = vld [vmem:[%s743] sm:$0xff]
      %746 = vrot.lane.b32.xlu0 %v742, 96
      %v747 = vpop.permute.xlu0 %746
      %v748 = vsel %vm526, %v747, 0
      %750 = vmatprep.subr.mxu0 0.0
      %751 = vmatpush1.msra.mxu0 %v522
      %752 = vmatprep.subr.mxu0 0.0
      %753 = vmatpush1.msra.mxu0 %v523
      %754 = vmatprep.subr.mxu0 0.0
      %755 = vmatpush1.msra.mxu0 %v524
      %756 = vmatprep.subr.mxu0 0.0
      %757 = vmatpush1.msra.mxu0 %v525
      %758 = vmatprep.subr.mxu0 0.0
      %759 = vmatpush1.msra.mxu0 0.0
      %760 = vmatprep.subr.mxu0 0.0
      %761 = vmatpush1.msra.mxu0 0.0
      %762 = vmatprep.subr.mxu0 0.0
      %763 = vmatpush1.msra.mxu0 0.0
      %764 = vmatprep.subr.mxu0 0.0
      %765 = vmatpush1.msra.mxu0 0.0
      %766 = vmatprep.subr.mxu0 0.0
      %767 = vmatpush1.msra.mxu0 0.0
      %768 = vmatprep.subr.mxu0 0.0
      %769 = vmatpush1.msra.mxu0 0.0
      %770 = vmatprep.subr.mxu0 0.0
      %771 = vmatpush1.msra.mxu0 0.0
      %772 = vmatprep.subr.mxu0 0.0
      %773 = vmatpush1.msra.mxu0 0.0
      %774 = vmatprep.subr.mxu0 0.0
      %775 = vmatpush1.msra.mxu0 0.0
      %776 = vmatprep.subr.mxu0 0.0
      %777 = vmatpush1.msra.mxu0 0.0
      %778 = vmatprep.subr.mxu0 0.0
      %779 = vmatpush1.msra.mxu0 0.0
      %780 = vmatprep.subr.mxu0 0.0
      %781 = vmatpush1.msra.mxu0 0.0
      %782 = vmatprep.subr.mxu0 0.0
      %783 = vmatpush1.msra.mxu0 0.0
      %784 = vmatprep.subr.mxu0 0.0
      %785 = vmatpush1.msra.mxu0 0.0
      %786 = vmatprep.subr.mxu0 0.0
      %787 = vmatpush1.msra.mxu0 0.0
      %788 = vmatprep.subr.mxu0 0.0
      %789 = vmatpush1.msra.mxu0 0.0
      %790 = vmatprep.subr.mxu0 0.0
      %791 = vmatpush1.msra.mxu0 0.0
      %792 = vmatprep.subr.mxu0 0.0
      %793 = vmatpush1.msra.mxu0 0.0
      %794 = vmatprep.subr.mxu0 0.0
      %795 = vmatpush1.msra.mxu0 0.0
      %796 = vmatprep.subr.mxu0 0.0
      %797 = vmatpush1.msra.mxu0 0.0
      %798 = vmatprep.subr.mxu0 0.0
      %799 = vmatpush1.msra.mxu0 0.0
      %800 = vmatprep.subr.mxu0 0.0
      %801 = vmatpush1.msra.mxu0 0.0
      %802 = vmatprep.subr.mxu0 0.0
      %803 = vmatpush1.msra.mxu0 0.0
      %804 = vmatprep.subr.mxu0 0.0
      %805 = vmatpush1.msra.mxu0 0.0
      %806 = vmatprep.subr.mxu0 0.0
      %807 = vmatpush1.msra.mxu0 0.0
      %808 = vmatprep.subr.mxu0 0.0
      %809 = vmatpush1.msra.mxu0 0.0
      %810 = vmatprep.subr.mxu0 0.0
      %811 = vmatpush1.msra.mxu0 0.0
      %812 = vmatprep.subr.mxu0 0.0
      %813 = vmatpush1.msra.mxu0 0.0
      %814 = vmatprep.mubr.f32.mxu0 0.0
      %815 = vmatmul.mubr.f32.gmra.mrb[0].mxu0 %v748
      %v816 = vpop.f32.mrb[0].mxu0
      %v817 = vadd.f32 %v518, %v816
      %v818 = vpop.f32.mrb[0].mxu0
      %819 = vdwg.mxu0
      %v820 = vadd.f32 %v744, %v817
      %v821 = vxor.u32 %v820, 2147483648
      %v822 = vmul.f32 %v821, 1.442695
      %v823 = vpow.pop %v822
      %v824 = vadd.f32 %v823, 1.0
      %v825 = vrcp.pop %v824
      %v826 = vmul.f32 1.0, %v825
      %828 = vrot.lane.b32.xlu0 %v817, 64
      %v829 = vpop.permute.xlu0 %828
      %v831 = vmul.f32 %v826, %v829
      %833 = vrot.lane.b32.xlu0 %v831, 64
      %v834 = vpop.permute.xlu0 %833
      %v836 = vadd.f32 %v744, %v834
      %v837 = vtanh.pop %v836
      %v838 = vsub.f32 1.0, %v826
      %840 = vrot.lane.b32.xlu0 %v837, 96
      %v841 = vpop.permute.xlu0 %840
      %v843 = vmul.f32 %v838, %v841
      %v844 = vmul.f32 %v826, %v742
      %v845 = vadd.f32 %v843, %v844
      %s846 = sadd.s32 %s387, 2
      %p847 = scmp.lt.s32.totalorder %s846, 8
      %s848 = scalar_select %p847, 1, 0
      %v849 = vstv %s848
      %vm850 = vcmp.eq.s32.totalorder %v849, 1
      %v851 = vsel %vm850, %v845, %v742
      %s852 = scalar_lea.vmem [#allocation2], 24
      %v853 = vld [vmem:[%s852] sm:$0xff]
      %855 = vrot.lane.b32.xlu0 %v851, 96
      %v856 = vpop.permute.xlu0 %855
      %v857 = vsel %vm526, %v856, 0
      %859 = vmatprep.subr.mxu0 0.0
      %860 = vmatpush1.msra.mxu0 %v522
      %861 = vmatprep.subr.mxu0 0.0
      %862 = vmatpush1.msra.mxu0 %v523
      %863 = vmatprep.subr.mxu0 0.0
      %864 = vmatpush1.msra.mxu0 %v524
      %865 = vmatprep.subr.mxu0 0.0
      %866 = vmatpush1.msra.mxu0 %v525
      %867 = vmatprep.subr.mxu0 0.0
      %868 = vmatpush1.msra.mxu0 0.0
      %869 = vmatprep.subr.mxu0 0.0
      %870 = vmatpush1.msra.mxu0 0.0
      %871 = vmatprep.subr.mxu0 0.0
      %872 = vmatpush1.msra.mxu0 0.0
      %873 = vmatprep.subr.mxu0 0.0
      %874 = vmatpush1.msra.mxu0 0.0
      %875 = vmatprep.subr.mxu0 0.0
      %876 = vmatpush1.msra.mxu0 0.0
      %877 = vmatprep.subr.mxu0 0.0
      %878 = vmatpush1.msra.mxu0 0.0
      %879 = vmatprep.subr.mxu0 0.0
      %880 = vmatpush1.msra.mxu0 0.0
      %881 = vmatprep.subr.mxu0 0.0
      %882 = vmatpush1.msra.mxu0 0.0
      %883 = vmatprep.subr.mxu0 0.0
      %884 = vmatpush1.msra.mxu0 0.0
      %885 = vmatprep.subr.mxu0 0.0
      %886 = vmatpush1.msra.mxu0 0.0
      %887 = vmatprep.subr.mxu0 0.0
      %888 = vmatpush1.msra.mxu0 0.0
      %889 = vmatprep.subr.mxu0 0.0
      %890 = vmatpush1.msra.mxu0 0.0
      %891 = vmatprep.subr.mxu0 0.0
      %892 = vmatpush1.msra.mxu0 0.0
      %893 = vmatprep.subr.mxu0 0.0
      %894 = vmatpush1.msra.mxu0 0.0
      %895 = vmatprep.subr.mxu0 0.0
      %896 = vmatpush1.msra.mxu0 0.0
      %897 = vmatprep.subr.mxu0 0.0
      %898 = vmatpush1.msra.mxu0 0.0
      %899 = vmatprep.subr.mxu0 0.0
      %900 = vmatpush1.msra.mxu0 0.0
      %901 = vmatprep.subr.mxu0 0.0
      %902 = vmatpush1.msra.mxu0 0.0
      %903 = vmatprep.subr.mxu0 0.0
      %904 = vmatpush1.msra.mxu0 0.0
      %905 = vmatprep.subr.mxu0 0.0
      %906 = vmatpush1.msra.mxu0 0.0
      %907 = vmatprep.subr.mxu0 0.0
      %908 = vmatpush1.msra.mxu0 0.0
      %909 = vmatprep.subr.mxu0 0.0
      %910 = vmatpush1.msra.mxu0 0.0
      %911 = vmatprep.subr.mxu0 0.0
      %912 = vmatpush1.msra.mxu0 0.0
      %913 = vmatprep.subr.mxu0 0.0
      %914 = vmatpush1.msra.mxu0 0.0
      %915 = vmatprep.subr.mxu0 0.0
      %916 = vmatpush1.msra.mxu0 0.0
      %917 = vmatprep.subr.mxu0 0.0
      %918 = vmatpush1.msra.mxu0 0.0
      %919 = vmatprep.subr.mxu0 0.0
      %920 = vmatpush1.msra.mxu0 0.0
      %921 = vmatprep.subr.mxu0 0.0
      %922 = vmatpush1.msra.mxu0 0.0
      %923 = vmatprep.mubr.f32.mxu0 0.0
      %924 = vmatmul.mubr.f32.gmra.mrb[0].mxu0 %v857
      %v925 = vpop.f32.mrb[0].mxu0
      %v926 = vadd.f32 %v518, %v925
      %v927 = vpop.f32.mrb[0].mxu0
      %928 = vdwg.mxu0
      %v929 = vadd.f32 %v853, %v926
      %v930 = vxor.u32 %v929, 2147483648
      %v931 = vmul.f32 %v930, 1.442695
      %v932 = vpow.pop %v931
      %v933 = vadd.f32 %v932, 1.0
      %v934 = vrcp.pop %v933
      %v935 = vmul.f32 1.0, %v934
      %937 = vrot.lane.b32.xlu0 %v926, 64
      %v938 = vpop.permute.xlu0 %937
      %v940 = vmul.f32 %v935, %v938
      %942 = vrot.lane.b32.xlu0 %v940, 64
      %v943 = vpop.permute.xlu0 %942
      %v945 = vadd.f32 %v853, %v943
      %v946 = vtanh.pop %v945
      %v947 = vsub.f32 1.0, %v935
      %949 = vrot.lane.b32.xlu0 %v946, 96
      %v950 = vpop.permute.xlu0 %949
      %v952 = vmul.f32 %v947, %v950
      %v953 = vmul.f32 %v935, %v851
      %v954 = vadd.f32 %v952, %v953
      %s955 = sadd.s32 %s387, 3
      %p956 = scmp.lt.s32.totalorder %s955, 8
      %s957 = scalar_select %p956, 1, 0
      %v958 = vstv %s957
      %vm959 = vcmp.eq.s32.totalorder %v958, 1
      %v960 = vsel %vm959, %v954, %v851
      %962 = vrot.lane.b32.xlu0 %v960, 96
      %v963 = vpop.permute.xlu0 %962
      %965 = vst.msk [vmem:[%s386] sm:$0xff] %vm526, %v963
      %p966 = scmp.eq.s32.totalorder %s26, 1
      // Predicated region
      $region57: #{seq_gru_forward.1} parent=51 // pred_check
        %p967 = pneg %p966
      $region58: #{seq_gru_forward.1} parent=51 // pred_check_branch
        %969 = sbr.rel (%p967) target = $region60
      $region59: #{seq_gru_forward.1} parent=51 // pred_region
        %v970 = vld [vmem:[%s6] sm:$0xff]
        %v971 = vld [vmem:[%s6 + $0x8] sm:$0xff]
        %v972 = vld [vmem:[%s6 + $0x10] sm:$0xff]
        %v973 = vld [vmem:[%s6 + $0x18] sm:$0xff]
        %v974 = vld [vmem:[%s7] sm:$0x1]
        %v976 = vlaneseq
        %v977 = vshrl.u32 %v976, 7
        %v978 = vsub.s32 0, %v977
        %v979 = vrot.slane %v974, %v978
        %v981 = vsel %vm526, %v963, 0
        %983 = vmatprep.subr.mxu0 0.0
        %984 = vmatpush1.msra.mxu0 %v970
        %985 = vmatprep.subr.mxu0 0.0
        %986 = vmatpush1.msra.mxu0 %v971
        %987 = vmatprep.subr.mxu0 0.0
        %988 = vmatpush1.msra.mxu0 %v972
        %989 = vmatprep.subr.mxu0 0.0
        %990 = vmatpush1.msra.mxu0 %v973
        %991 = vmatprep.subr.mxu0 0.0
        %992 = vmatpush1.msra.mxu0 0.0
        %993 = vmatprep.subr.mxu0 0.0
        %994 = vmatpush1.msra.mxu0 0.0
        %995 = vmatprep.subr.mxu0 0.0
        %996 = vmatpush1.msra.mxu0 0.0
        %997 = vmatprep.subr.mxu0 0.0
        %998 = vmatpush1.msra.mxu0 0.0
        %999 = vmatprep.subr.mxu0 0.0
        %1000 = vmatpush1.msra.mxu0 0.0
        %1001 = vmatprep.subr.mxu0 0.0
        %1002 = vmatpush1.msra.mxu0 0.0
        %1003 = vmatprep.subr.mxu0 0.0
        %1004 = vmatpush1.msra.mxu0 0.0
        %1005 = vmatprep.subr.mxu0 0.0
        %1006 = vmatpush1.msra.mxu0 0.0
        %1007 = vmatprep.subr.mxu0 0.0
        %1008 = vmatpush1.msra.mxu0 0.0
        %1009 = vmatprep.subr.mxu0 0.0
        %1010 = vmatpush1.msra.mxu0 0.0
        %1011 = vmatprep.subr.mxu0 0.0
        %1012 = vmatpush1.msra.mxu0 0.0
        %1013 = vmatprep.subr.mxu0 0.0
        %1014 = vmatpush1.msra.mxu0 0.0
        %1015 = vmatprep.subr.mxu0 0.0
        %1016 = vmatpush1.msra.mxu0 0.0
        %1017 = vmatprep.subr.mxu0 0.0
        %1018 = vmatpush1.msra.mxu0 0.0
        %1019 = vmatprep.subr.mxu0 0.0
        %1020 = vmatpush1.msra.mxu0 0.0
        %1021 = vmatprep.subr.mxu0 0.0
        %1022 = vmatpush1.msra.mxu0 0.0
        %1023 = vmatprep.subr.mxu0 0.0
        %1024 = vmatpush1.msra.mxu0 0.0
        %1025 = vmatprep.subr.mxu0 0.0
        %1026 = vmatpush1.msra.mxu0 0.0
        %1027 = vmatprep.subr.mxu0 0.0
        %1028 = vmatpush1.msra.mxu0 0.0
        %1029 = vmatprep.subr.mxu0 0.0
        %1030 = vmatpush1.msra.mxu0 0.0
        %1031 = vmatprep.subr.mxu0 0.0
        %1032 = vmatpush1.msra.mxu0 0.0
        %1033 = vmatprep.subr.mxu0 0.0
        %1034 = vmatpush1.msra.mxu0 0.0
        %1035 = vmatprep.subr.mxu0 0.0
        %1036 = vmatpush1.msra.mxu0 0.0
        %1037 = vmatprep.subr.mxu0 0.0
        %1038 = vmatpush1.msra.mxu0 0.0
        %1039 = vmatprep.subr.mxu0 0.0
        %1040 = vmatpush1.msra.mxu0 0.0
        %1041 = vmatprep.subr.mxu0 0.0
        %1042 = vmatpush1.msra.mxu0 0.0
        %1043 = vmatprep.subr.mxu0 0.0
        %1044 = vmatpush1.msra.mxu0 0.0
        %1045 = vmatprep.subr.mxu0 0.0
        %1046 = vmatpush1.msra.mxu0 0.0
        %1047 = vmatprep.mubr.f32.mxu0 0.0
        %1048 = vmatmul.mubr.f32.gmra.mrb[0].mxu0 %v981
        %v1049 = vpop.f32.mrb[0].mxu0
        %v1050 = vadd.f32 %v979, %v1049
        %v1051 = vpop.f32.mrb[0].mxu0
        %1052 = vdwg.mxu0
        %vm1053 = vcmask 15360
        %1054 = vst.msk [vmem:[%s382] sm:$0xff] %vm1053, %v1050
      $region60: #{seq_gru_forward.1} parent=51 // pred_fallthru
        _
      %p1055 = scmp.lt.s32.totalorder %s25, 0
      %s1056 = scalar_select %p1055, %s25, 0
      %s1057 = smul.addr %s1056, 8
      %s1058 = scalar_lea.vmem %s8, %s1057
      %p1059 = scmp.lt.s32.totalorder %s25, 0
      %s1060 = scalar_select %p1059, %s25, 0
      %s1061 = smul.addr %s1060, 8
      %s1062 = scalar_lea.vmem %s9, %s1061
      // Predicated region
      $region61: #{seq_gru_forward.1} parent=51 // pred_check
        %p1063 = pneg %p231
      $region62: #{seq_gru_forward.1} parent=51 // pred_check_branch
        %1065 = sbr.rel (%p1063) target = $region64
      $region63: #{seq_gru_forward.1} parent=51 // pred_region
        _
      $region64: #{seq_gru_forward.1} parent=51 // pred_fallthru
        _
      // Predicated region
      $region65: #{seq_gru_forward.1} parent=51 // pred_check
        %p1066 = pneg %p257
      $region66: #{seq_gru_forward.1} parent=51 // pred_check_branch
        %1068 = sbr.rel (%p1066) target = $region68
      $region67: #{seq_gru_forward.1} parent=51 // pred_region
        _
      $region68: #{seq_gru_forward.1} parent=51 // pred_fallthru
        _
      // Predicated region
      $region69: #{seq_gru_forward.1} parent=51 // pred_check
        %p1069 = pneg %p231
      $region70: #{seq_gru_forward.1} parent=51 // pred_check_branch
        %1071 = sbr.rel (%p1069) target = $region72
      $region71: #{seq_gru_forward.1} parent=51 // pred_region
        %p1072 = scmp.lt.s32.totalorder %s25, 0
        %s1073 = scalar_select %p1072, %s25, 0
        %s1074 = smul.addr %s1073, 8
        %s1075 = scalar_lea.vmem %s8, %s1074
      $region72: #{seq_gru_forward.1} parent=51 // pred_fallthru
        _
      // Predicated region
      $region73: #{seq_gru_forward.1} parent=51 // pred_check
        %p1076 = pneg %p257
      $region74: #{seq_gru_forward.1} parent=51 // pred_check_branch
        %1078 = sbr.rel (%p1076) target = $region76
      $region75: #{seq_gru_forward.1} parent=51 // pred_region
        %p1079 = scmp.lt.s32.totalorder %s25, 0
        %s1080 = scalar_select %p1079, %s25, 0
        %s1081 = smul.addr %s1080, 8
        %s1082 = scalar_lea.vmem %s9, %s1081
      $region76: #{seq_gru_forward.1} parent=51 // pred_fallthru
        _
    $region52: #{seq_gru_forward.1} parent=5 // pred_fallthru
      _
    %p1083 = scmp.le.s32.totalorder 2, %s16
    // Predicated region
    $region77: #{seq_gru_forward.1} parent=5 // pred_check
      %p1084 = pneg %p1083
    $region78: #{seq_gru_forward.1} parent=5 // pred_check_branch
      %1086 = sbr.rel (%p1084) target = $region80
    $region79: #{seq_gru_forward.1} parent=5 // pred_region
      %s1087 = ssub.s32 %s16, 2
    $region80: #{seq_gru_forward.1} parent=5 // pred_fallthru
      _
  $region6: #{seq_gru_forward.1} parent=0 // loop_footer
    %s20 = sadd.s32 1, %s16
  $region7: #{seq_gru_forward.1} parent=0 // loop_footer_branch
    %15 = sbr.rel target = $region3
  $region8: #{seq_gru_forward.1} parent=0 // loop_exit
    _

</llo_original>
